<compile_context>
chip_gen: v5e
topology: v5e:2x2
jax: 0.10.0
libtpu: 0.0.40
codegen_flags: <defaults>
</compile_context>

<pallas_src>
import collections as col
from functools import partial

import jax
import jax.numpy as jnp
from jax.experimental import pallas as pl
from jax.experimental.pallas import tpu as pltpu


def _round_up(x, m):
    return (x + m - 1) // m * m


# ----------------------------- Pallas kernel --------------------------------

def _matmul_bias_kernel(x_ref, w_ref, b_ref, o_ref, *, relu):
    # x_ref: (tm, K) bf16   w_ref: (K, Cp) bf16   b_ref: (1, Cp) f32
    # o_ref: (tm, Cp) f32 or bf16 (cast only at the store; epilogue stays f32,
    # which is also the right choice for v5e's f32-only VALU).
    acc = jnp.dot(x_ref[...], w_ref[...], preferred_element_type=jnp.float32)
    acc = acc + b_ref[...]
    if relu:
        acc = jnp.maximum(acc, 0.0)
    o_ref[...] = acc.astype(o_ref.dtype)


def matmul_bias_act(x2d, wp, bp, cout, relu):
    """x2d: (M, K) bf16, wp: (K, Cp) bf16 (pre-padded), bp: (1, Cp) f32.

    K is NOT padded (full-extent block on both operands), so the per-step
    activation DMA only moves real bytes.  Cp is a 128 multiple -> unmasked
    lane-dense stores.  ReLU convs emit bf16 (halves HBM writeback and removes
    the consumer-side astype); non-ReLU (module-output) convs emit f32.
    VMEM per step is < 0.5 MiB -> safe on v5e/v6e/v7x scoped-VMEM defaults.
    TODO(synk): if this is ever run at production channel counts (Kp in the
    thousands), add a K grid axis + VMEM f32 accumulator before the resident
    weight block approaches v7x's 64 MiB VMEM."""
    M, K = x2d.shape
    Cp = wp.shape[1]
    out_dtype = jnp.bfloat16 if relu else jnp.float32

    # >=2 grid steps once M is large enough (both v7x TCs see work on the stem
    # and level-0 convs); a single block for tiny layers avoids per-step
    # pipeline overhead.  tm is a multiple of 16 (bf16 sublane packing).
    if M >= 256:
        tm = 256
    elif M >= 128:
        tm = _round_up(M // 2, 16)
    else:
        tm = _round_up(M, 16)
    Mp = _round_up(M, tm)
    xp = x2d if Mp == M else jnp.pad(x2d, ((0, Mp - M), (0, 0)))

    out = pl.pallas_call(
        partial(_matmul_bias_kernel, relu=relu),
        out_shape=jax.ShapeDtypeStruct((Mp, Cp), out_dtype),
        grid=(Mp // tm,),
        in_specs=[
            pl.BlockSpec((tm, K), lambda i: (i, 0)),   # full (unpadded) K
            pl.BlockSpec((K, Cp), lambda i: (0, 0)),   # weights resident
            pl.BlockSpec((1, Cp), lambda i: (0, 0)),
        ],
        out_specs=pl.BlockSpec((tm, Cp), lambda i: (i, 0)),
        compiler_params=pltpu.CompilerParams(
            dimension_semantics=("parallel",)),
    )(xp, wp, bp)
    return out[:M, :cout]


# ------------------------------- conv glue ----------------------------------

def conv2d_3x3(x, wp, bp, cout, *, stride=1, relu=False):
    """PyTorch nn.Conv2d(Cin, Cout, 3, stride, padding=1) semantics.
    x: (N, H, W, Cin) NHWC (f32 or bf16); wp/bp: pre-packed matmul weights.
    im2col patch extraction is XLA glue in bf16; the matmul + bias (+ ReLU)
    hot path runs inside the Pallas kernel with f32 accumulation.
    TODO(synk): at these toy sizes per-call dispatch dominates; the four rz
    convs could be batched into one pallas_call with a PrefetchScalarGridSpec
    offset/K table if further wall-clock reduction is needed."""
    N, H, W, Cin = x.shape
    Ho = (H + 2 - 3) // stride + 1
    Wo = (W + 2 - 3) // stride + 1
    xb = x if x.dtype == jnp.bfloat16 else x.astype(jnp.bfloat16)
    xp = jnp.pad(xb, ((0, 0), (1, 1), (1, 1), (0, 0)))
    cols = []
    for ky in range(3):
        for kx in range(3):
            cols.append(
                xp[:, ky:ky + (Ho - 1) * stride + 1:stride,
                      kx:kx + (Wo - 1) * stride + 1:stride, :])
    patches = jnp.concatenate(cols, axis=-1).reshape(N * Ho * Wo, 9 * Cin)
    out = matmul_bias_act(patches, wp, bp, cout, relu)
    return out.reshape(N, Ho, Wo, cout)


def maxpool_1_2_0(x):
    """nn.MaxPool2d(kernel_size=1, stride=2, padding=0) == stride-2 subsample.
    Zero-FLOP strided copy -> plain XLA slice; no pallas_call dispatch."""
    return x[:, ::2, ::2, :]


# --------------------------- parameter construction -------------------------

def init_params(key, *, input_channels, num_filters, num_layers,
                out_channels_backbone):
    """Parameters in the PyTorch nn.Conv2d layout (Cout, Cin, 3, 3)."""
    def conv_init(k, cout, cin):
        kw, kb = jax.random.split(k)
        w = jax.random.normal(kw, (cout, cin, 3, 3), jnp.float32) * 0.1
        b = jax.random.normal(kb, (cout,), jnp.float32) * 0.01
        return w, b

    keys = jax.random.split(key, 1 + 2 * num_layers)
    params = {}
    params["stem_w"], params["stem_b"] = conv_init(keys[0], num_filters,
                                                   input_channels)
    layer_w, layer_b, rz_w, rz_b = [], [], [], []
    cin = num_filters
    for i in range(num_layers):
        cout = num_filters * (2 ** i)        # num_filters * expansion * 2**ii
        w, b = conv_init(keys[1 + i], cout, cin)
        layer_w.append(w); layer_b.append(b)
        wr, br = conv_init(keys[1 + num_layers + i], out_channels_backbone, cout)
        rz_w.append(wr); rz_b.append(br)
        cin = cout
    params.update(layer_w=layer_w, layer_b=layer_b, rz_w=rz_w, rz_b=rz_b)
    return params


def _pack_conv(w, b):
    """One-time: (Cout,Cin,3,3) -> (9*Cin, Cp) bf16 matmul weight (Cp lane-dense
    128 multiple) and (1, Cp) f32 bias.  Done once so no per-call glue."""
    cout, cin = w.shape[0], w.shape[1]
    K = 9 * cin
    Cp = _round_up(cout, 128)
    wmat = jnp.transpose(w, (2, 3, 1, 0)).reshape(K, cout)
    wp = jnp.pad(wmat, ((0, 0), (0, Cp - cout))).astype(jnp.bfloat16)
    bp = jnp.pad(b, (0, Cp - cout)).astype(jnp.float32).reshape(1, Cp)
    return wp, bp


def pack_params(params):
    packed = {"layer_w": [], "layer_b": [], "rz_w": [], "rz_b": []}
    packed["stem_w"], packed["stem_b"] = _pack_conv(params["stem_w"],
                                                    params["stem_b"])
    for w, b in zip(params["layer_w"], params["layer_b"]):
        wp, bp = _pack_conv(w, b)
        packed["layer_w"].append(wp); packed["layer_b"].append(bp)
    for w, b in zip(params["rz_w"], params["rz_b"]):
        wp, bp = _pack_conv(w, b)
        packed["rz_w"].append(wp); packed["rz_b"].append(bp)
    return packed


# -------------------------------- forward -----------------------------------

def rec_resnet_body(x, packed, num_filters, num_layers):
    # TODO(synk): RecResNet internals (recurrent feedback connections, RNN
    # cells, frozen BatchNorm, time_steps) were not provided in the source; the
    # body is approximated by a deterministic feed-forward conv pyramid whose
    # outputs h[ii] have the correct channel count (num_filters * 2**ii) and
    # halved spatial resolution per level.
    y = conv2d_3x3(x, packed["stem_w"], packed["stem_b"], num_filters,
                   stride=2, relu=True)
    y = maxpool_1_2_0(y)                     # first pool (stride-2 subsample)
    h = []
    for i in range(num_layers):
        s = 1 if i == 0 else 2
        cout = num_filters * (2 ** i)
        y = conv2d_3x3(y, packed["layer_w"][i], packed["layer_b"][i], cout,
                       stride=s, relu=True)
        h.append(y)
    return None, h


@partial(jax.jit, static_argnames=("num_filters", "num_layers", "out_ch"))
def rec_resnet_backbone_forward(x_nchw, packed, *, num_filters, num_layers,
                                out_ch):
    x = jnp.transpose(x_nchw, (0, 2, 3, 1))  # NCHW -> NHWC once at the boundary
    _, h = rec_resnet_body(x, packed, num_filters, num_layers)
    extra_features = 5 - len(h)
    output = []
    tensor = None
    for ii, value in enumerate(h):
        tensor = conv2d_3x3(value, packed["rz_w"][ii], packed["rz_b"][ii],
                            out_ch, stride=1, relu=False)
        output.append((str(ii), tensor))
    last_idx = len(h) - 1
    tensor = maxpool_1_2_0(tensor)           # self.add_new_feat
    for jj in range(extra_features):
        output.append((str(last_idx + 1 + jj), tensor))
        tensor = maxpool_1_2_0(tensor)
    # Return in PyTorch NCHW convention (single transpose per output level).
    return col.OrderedDict((k, jnp.transpose(v, (0, 3, 1, 2)))
                           for k, v in output)


# --------------------------------- main --------------------------------------

if __name__ == "__main__":
    N, Cin, Hin, Win = 2, 3, 32, 32
    num_filters, num_layers, out_channels_backbone = 8, 4, 32

    key = jax.random.PRNGKey(0)
    kx, kp = jax.random.split(key)
    x = jax.random.normal(kx, (N, Cin, Hin, Win), jnp.float32)
    params = init_params(kp, input_channels=Cin, num_filters=num_filters,
                         num_layers=num_layers,
                         out_channels_backbone=out_channels_backbone)
    packed = pack_params(params)              # one-time weight pack (no per-call glue)

    out = rec_resnet_backbone_forward(x, packed, num_filters=num_filters,
                                      num_layers=num_layers,
                                      out_ch=out_channels_backbone)
    for k, v in out.items():
        jax.block_until_ready(v)
    # Expected shapes (NCHW): "0":(2,32,8,8) "1":(2,32,4,4) "2":(2,32,2,2)
    #                         "3":(2,32,1,1) "4":(2,32,1,1)
    print("KERNEL_OK")
</pallas_src>

<mosaic_0001>
module attributes {stable_mosaic.version = 11 : i64} {
  func.func @_matmul_bias_kernel(%arg0: i32, %arg1: memref<256x27xbf16, #tpu.memory_space<vmem>>, %arg2: memref<27x128xbf16, #tpu.memory_space<vmem>>, %arg3: memref<1x128xf32, #tpu.memory_space<vmem>>, %arg4: memref<256x128xbf16, #tpu.memory_space<vmem>>) attributes {dimension_semantics = [#tpu.dimension_semantics<parallel>], iteration_bounds = array<i64: 2>, scalar_prefetch = 0 : i64, scratch_operands = 0 : i64, tpu.core_type = #tpu.core_type<tc>, window_params = [{transform_indices = @transform_0, window_bounds = array<i64: 256, 27>}, {pipeline_mode = #tpu.pipeline_mode<synchronous>, transform_indices = @transform_1, window_bounds = array<i64: 27, 128>}, {pipeline_mode = #tpu.pipeline_mode<synchronous>, transform_indices = @transform_2, window_bounds = array<i64: 1, 128>}, {transform_indices = @transform_3, window_bounds = array<i64: 256, 128>}]} {
    %c0 = arith.constant 0 : index
    %c0_0 = arith.constant 0 : index
    %0 = vector.load %arg1[%c0, %c0_0] : memref<256x27xbf16, #tpu.memory_space<vmem>>, vector<256x27xbf16>
    %c0_1 = arith.constant 0 : index
    %c0_2 = arith.constant 0 : index
    %1 = vector.load %arg2[%c0_1, %c0_2] : memref<27x128xbf16, #tpu.memory_space<vmem>>, vector<27x128xbf16>
    %cst = arith.constant dense<0.000000e+00> : vector<256x128xf32>
    %2 = tpu.matmul %0, %1, %cst {dimension_numbers = #tpu.dot_dimension_numbers<[1], [0], [0], [1], [0, 0, 1, 1], [], []>} : vector<256x27xbf16>, vector<27x128xbf16>, vector<256x128xf32> -> vector<256x128xf32>
    %c0_3 = arith.constant 0 : index
    %c0_4 = arith.constant 0 : index
    %3 = vector.load %arg3[%c0_3, %c0_4] : memref<1x128xf32, #tpu.memory_space<vmem>>, vector<1x128xf32>
    %4 = vector.broadcast %3 : vector<1x128xf32> to vector<256x128xf32>
    %5 = arith.addf %2, %4 : vector<256x128xf32>
    %cst_5 = arith.constant 0.000000e+00 : f32
    %6 = vector.broadcast %cst_5 : f32 to vector<256x128xf32>
    %7 = arith.maximumf %5, %6 : vector<256x128xf32>
    %8 = arith.truncf %7 : vector<256x128xf32> to vector<256x128xbf16>
    %c0_6 = arith.constant 0 : index
    %c0_7 = arith.constant 0 : index
    %9 = vector.load %arg4[%c0_6, %c0_7] : memref<256x128xbf16, #tpu.memory_space<vmem>>, vector<256x128xbf16>
    tpu.vector_store %arg4[%c0_6, %c0_7], %8 {strides = array<i32>} : memref<256x128xbf16, #tpu.memory_space<vmem>>, vector<256x128xbf16>,
    return
  }
  func.func @transform_0(%arg0: i32) -> (i32, i32) {
    %c0_i32 = arith.constant 0 : i32
    %c0_i32_0 = arith.constant 0 : i32
    return %arg0, %c0_i32 : i32, i32
  }
  func.func @transform_1(%arg0: i32) -> (i32, i32) {
    %c0_i32 = arith.constant 0 : i32
    %c0_i32_0 = arith.constant 0 : i32
    %c0_i32_1 = arith.constant 0 : i32
    return %c0_i32, %c0_i32_0 : i32, i32
  }
  func.func @transform_2(%arg0: i32) -> (i32, i32) {
    %c0_i32 = arith.constant 0 : i32
    %c0_i32_0 = arith.constant 0 : i32
    %c0_i32_1 = arith.constant 0 : i32
    return %c0_i32, %c0_i32_0 : i32, i32
  }
  func.func @transform_3(%arg0: i32) -> (i32, i32) {
    %c0_i32 = arith.constant 0 : i32
    %c0_i32_0 = arith.constant 0 : i32
    return %arg0, %c0_i32 : i32, i32
  }
}

module attributes {stable_mosaic.version = 11 : i64} {
  func.func @_matmul_bias_kernel(%arg0: i32, %arg1: memref<64x72xbf16, #tpu.memory_space<vmem>>, %arg2: memref<72x128xbf16, #tpu.memory_space<vmem>>, %arg3: memref<1x128xf32, #tpu.memory_space<vmem>>, %arg4: memref<64x128xbf16, #tpu.memory_space<vmem>>) attributes {dimension_semantics = [#tpu.dimension_semantics<parallel>], iteration_bounds = array<i64: 2>, scalar_prefetch = 0 : i64, scratch_operands = 0 : i64, tpu.core_type = #tpu.core_type<tc>, window_params = [{transform_indices = @transform_0, window_bounds = array<i64: 64, 72>}, {pipeline_mode = #tpu.pipeline_mode<synchronous>, transform_indices = @transform_1, window_bounds = array<i64: 72, 128>}, {pipeline_mode = #tpu.pipeline_mode<synchronous>, transform_indices = @transform_2, window_bounds = array<i64: 1, 128>}, {transform_indices = @transform_3, window_bounds = array<i64: 64, 128>}]} {
    %c0 = arith.constant 0 : index
    %c0_0 = arith.constant 0 : index
    %0 = vector.load %arg1[%c0, %c0_0] : memref<64x72xbf16, #tpu.memory_space<vmem>>, vector<64x72xbf16>
    %c0_1 = arith.constant 0 : index
    %c0_2 = arith.constant 0 : index
    %1 = vector.load %arg2[%c0_1, %c0_2] : memref<72x128xbf16, #tpu.memory_space<vmem>>, vector<72x128xbf16>
    %cst = arith.constant dense<0.000000e+00> : vector<64x128xf32>
    %2 = tpu.matmul %0, %1, %cst {dimension_numbers = #tpu.dot_dimension_numbers<[1], [0], [0], [1], [0, 0, 1, 1], [], []>} : vector<64x72xbf16>, vector<72x128xbf16>, vector<64x128xf32> -> vector<64x128xf32>
    %c0_3 = arith.constant 0 : index
    %c0_4 = arith.constant 0 : index
    %3 = vector.load %arg3[%c0_3, %c0_4] : memref<1x128xf32, #tpu.memory_space<vmem>>, vector<1x128xf32>
    %4 = vector.broadcast %3 : vector<1x128xf32> to vector<64x128xf32>
    %5 = arith.addf %2, %4 : vector<64x128xf32>
    %cst_5 = arith.constant 0.000000e+00 : f32
    %6 = vector.broadcast %cst_5 : f32 to vector<64x128xf32>
    %7 = arith.maximumf %5, %6 : vector<64x128xf32>
    %8 = arith.truncf %7 : vector<64x128xf32> to vector<64x128xbf16>
    %c0_6 = arith.constant 0 : index
    %c0_7 = arith.constant 0 : index
    %9 = vector.load %arg4[%c0_6, %c0_7] : memref<64x128xbf16, #tpu.memory_space<vmem>>, vector<64x128xbf16>
    tpu.vector_store %arg4[%c0_6, %c0_7], %8 {strides = array<i32>} : memref<64x128xbf16, #tpu.memory_space<vmem>>, vector<64x128xbf16>,
    return
  }
  func.func @transform_0(%arg0: i32) -> (i32, i32) {
    %c0_i32 = arith.constant 0 : i32
    %c0_i32_0 = arith.constant 0 : i32
    return %arg0, %c0_i32 : i32, i32
  }
  func.func @transform_1(%arg0: i32) -> (i32, i32) {
    %c0_i32 = arith.constant 0 : i32
    %c0_i32_0 = arith.constant 0 : i32
    %c0_i32_1 = arith.constant 0 : i32
    return %c0_i32, %c0_i32_0 : i32, i32
  }
  func.func @transform_2(%arg0: i32) -> (i32, i32) {
    %c0_i32 = arith.constant 0 : i32
    %c0_i32_0 = arith.constant 0 : i32
    %c0_i32_1 = arith.constant 0 : i32
    return %c0_i32, %c0_i32_0 : i32, i32
  }
  func.func @transform_3(%arg0: i32) -> (i32, i32) {
    %c0_i32 = arith.constant 0 : i32
    %c0_i32_0 = arith.constant 0 : i32
    return %arg0, %c0_i32 : i32, i32
  }
}

module attributes {stable_mosaic.version = 11 : i64} {
  func.func @_matmul_bias_kernel(%arg0: i32, %arg1: memref<32x72xbf16, #tpu.memory_space<vmem>>, %arg2: memref<72x128xbf16, #tpu.memory_space<vmem>>, %arg3: memref<1x128xf32, #tpu.memory_space<vmem>>, %arg4: memref<32x128xbf16, #tpu.memory_space<vmem>>) attributes {dimension_semantics = [#tpu.dimension_semantics<parallel>], iteration_bounds = array<i64: 1>, scalar_prefetch = 0 : i64, scratch_operands = 0 : i64, tpu.core_type = #tpu.core_type<tc>, window_params = [{transform_indices = @transform_0, window_bounds = array<i64: 32, 72>}, {pipeline_mode = #tpu.pipeline_mode<synchronous>, transform_indices = @transform_1, window_bounds = array<i64: 72, 128>}, {pipeline_mode = #tpu.pipeline_mode<synchronous>, transform_indices = @transform_2, window_bounds = array<i64: 1, 128>}, {transform_indices = @transform_3, window_bounds = array<i64: 32, 128>}]} {
    %c0 = arith.constant 0 : index
    %c0_0 = arith.constant 0 : index
    %0 = vector.load %arg1[%c0, %c0_0] : memref<32x72xbf16, #tpu.memory_space<vmem>>, vector<32x72xbf16>
    %c0_1 = arith.constant 0 : index
    %c0_2 = arith.constant 0 : index
    %1 = vector.load %arg2[%c0_1, %c0_2] : memref<72x128xbf16, #tpu.memory_space<vmem>>, vector<72x128xbf16>
    %cst = arith.constant dense<0.000000e+00> : vector<32x128xf32>
    %2 = tpu.matmul %0, %1, %cst {dimension_numbers = #tpu.dot_dimension_numbers<[1], [0], [0], [1], [0, 0, 1, 1], [], []>} : vector<32x72xbf16>, vector<72x128xbf16>, vector<32x128xf32> -> vector<32x128xf32>
    %c0_3 = arith.constant 0 : index
    %c0_4 = arith.constant 0 : index
    %3 = vector.load %arg3[%c0_3, %c0_4] : memref<1x128xf32, #tpu.memory_space<vmem>>, vector<1x128xf32>
    %4 = vector.broadcast %3 : vector<1x128xf32> to vector<32x128xf32>
    %5 = arith.addf %2, %4 : vector<32x128xf32>
    %cst_5 = arith.constant 0.000000e+00 : f32
    %6 = vector.broadcast %cst_5 : f32 to vector<32x128xf32>
    %7 = arith.maximumf %5, %6 : vector<32x128xf32>
    %8 = arith.truncf %7 : vector<32x128xf32> to vector<32x128xbf16>
    %c0_6 = arith.constant 0 : index
    %c0_7 = arith.constant 0 : index
    %9 = vector.load %arg4[%c0_6, %c0_7] : memref<32x128xbf16, #tpu.memory_space<vmem>>, vector<32x128xbf16>
    tpu.vector_store %arg4[%c0_6, %c0_7], %8 {strides = array<i32>} : memref<32x128xbf16, #tpu.memory_space<vmem>>, vector<32x128xbf16>,
    return
  }
  func.func @transform_0(%arg0: i32) -> (i32, i32) {
    %c0_i32 = arith.constant 0 : i32
    %c0_i32_0 = arith.constant 0 : i32
    return %arg0, %c0_i32 : i32, i32
  }
  func.func @transform_1(%arg0: i32) -> (i32, i32) {
    %c0_i32 = arith.constant 0 : i32
    %c0_i32_0 = arith.constant 0 : i32
    %c0_i32_1 = arith.constant 0 : i32
    return %c0_i32, %c0_i32_0 : i32, i32
  }
  func.func @transform_2(%arg0: i32) -> (i32, i32) {
    %c0_i32 = arith.constant 0 : i32
    %c0_i32_0 = arith.constant 0 : i32
    %c0_i32_1 = arith.constant 0 : i32
    return %c0_i32, %c0_i32_0 : i32, i32
  }
  func.func @transform_3(%arg0: i32) -> (i32, i32) {
    %c0_i32 = arith.constant 0 : i32
    %c0_i32_0 = arith.constant 0 : i32
    return %arg0, %c0_i32 : i32, i32
  }
}

module attributes {stable_mosaic.version = 11 : i64} {
  func.func @_matmul_bias_kernel(%arg0: i32, %arg1: memref<16x144xbf16, #tpu.memory_space<vmem>>, %arg2: memref<144x128xbf16, #tpu.memory_space<vmem>>, %arg3: memref<1x128xf32, #tpu.memory_space<vmem>>, %arg4: memref<16x128xbf16, #tpu.memory_space<vmem>>) attributes {dimension_semantics = [#tpu.dimension_semantics<parallel>], iteration_bounds = array<i64: 1>, scalar_prefetch = 0 : i64, scratch_operands = 0 : i64, tpu.core_type = #tpu.core_type<tc>, window_params = [{transform_indices = @transform_0, window_bounds = array<i64: 16, 144>}, {pipeline_mode = #tpu.pipeline_mode<synchronous>, transform_indices = @transform_1, window_bounds = array<i64: 144, 128>}, {pipeline_mode = #tpu.pipeline_mode<synchronous>, transform_indices = @transform_2, window_bounds = array<i64: 1, 128>}, {transform_indices = @transform_3, window_bounds = array<i64: 16, 128>}]} {
    %c0 = arith.constant 0 : index
    %c0_0 = arith.constant 0 : index
    %0 = vector.load %arg1[%c0, %c0_0] : memref<16x144xbf16, #tpu.memory_space<vmem>>, vector<16x144xbf16>
    %c0_1 = arith.constant 0 : index
    %c0_2 = arith.constant 0 : index
    %1 = vector.load %arg2[%c0_1, %c0_2] : memref<144x128xbf16, #tpu.memory_space<vmem>>, vector<144x128xbf16>
    %cst = arith.constant dense<0.000000e+00> : vector<16x128xf32>
    %2 = tpu.matmul %0, %1, %cst {dimension_numbers = #tpu.dot_dimension_numbers<[1], [0], [0], [1], [0, 0, 1, 1], [], []>} : vector<16x144xbf16>, vector<144x128xbf16>, vector<16x128xf32> -> vector<16x128xf32>
    %c0_3 = arith.constant 0 : index
    %c0_4 = arith.constant 0 : index
    %3 = vector.load %arg3[%c0_3, %c0_4] : memref<1x128xf32, #tpu.memory_space<vmem>>, vector<1x128xf32>
    %4 = vector.broadcast %3 : vector<1x128xf32> to vector<16x128xf32>
    %5 = arith.addf %2, %4 : vector<16x128xf32>
    %cst_5 = arith.constant 0.000000e+00 : f32
    %6 = vector.broadcast %cst_5 : f32 to vector<16x128xf32>
    %7 = arith.maximumf %5, %6 : vector<16x128xf32>
    %8 = arith.truncf %7 : vector<16x128xf32> to vector<16x128xbf16>
    %c0_6 = arith.constant 0 : index
    %c0_7 = arith.constant 0 : index
    %9 = vector.load %arg4[%c0_6, %c0_7] : memref<16x128xbf16, #tpu.memory_space<vmem>>, vector<16x128xbf16>
    tpu.vector_store %arg4[%c0_6, %c0_7], %8 {strides = array<i32>} : memref<16x128xbf16, #tpu.memory_space<vmem>>, vector<16x128xbf16>,
    return
  }
  func.func @transform_0(%arg0: i32) -> (i32, i32) {
    %c0_i32 = arith.constant 0 : i32
    %c0_i32_0 = arith.constant 0 : i32
    return %arg0, %c0_i32 : i32, i32
  }
  func.func @transform_1(%arg0: i32) -> (i32, i32) {
    %c0_i32 = arith.constant 0 : i32
    %c0_i32_0 = arith.constant 0 : i32
    %c0_i32_1 = arith.constant 0 : i32
    return %c0_i32, %c0_i32_0 : i32, i32
  }
  func.func @transform_2(%arg0: i32) -> (i32, i32) {
    %c0_i32 = arith.constant 0 : i32
    %c0_i32_0 = arith.constant 0 : i32
    %c0_i32_1 = arith.constant 0 : i32
    return %c0_i32, %c0_i32_0 : i32, i32
  }
  func.func @transform_3(%arg0: i32) -> (i32, i32) {
    %c0_i32 = arith.constant 0 : i32
    %c0_i32_0 = arith.constant 0 : i32
    return %arg0, %c0_i32 : i32, i32
  }
}

module attributes {stable_mosaic.version = 11 : i64} {
  func.func @_matmul_bias_kernel(%arg0: i32, %arg1: memref<16x288xbf16, #tpu.memory_space<vmem>>, %arg2: memref<288x128xbf16, #tpu.memory_space<vmem>>, %arg3: memref<1x128xf32, #tpu.memory_space<vmem>>, %arg4: memref<16x128xbf16, #tpu.memory_space<vmem>>) attributes {dimension_semantics = [#tpu.dimension_semantics<parallel>], iteration_bounds = array<i64: 1>, scalar_prefetch = 0 : i64, scratch_operands = 0 : i64, tpu.core_type = #tpu.core_type<tc>, window_params = [{transform_indices = @transform_0, window_bounds = array<i64: 16, 288>}, {pipeline_mode = #tpu.pipeline_mode<synchronous>, transform_indices = @transform_1, window_bounds = array<i64: 288, 128>}, {pipeline_mode = #tpu.pipeline_mode<synchronous>, transform_indices = @transform_2, window_bounds = array<i64: 1, 128>}, {transform_indices = @transform_3, window_bounds = array<i64: 16, 128>}]} {
    %c0 = arith.constant 0 : index
    %c0_0 = arith.constant 0 : index
    %0 = vector.load %arg1[%c0, %c0_0] : memref<16x288xbf16, #tpu.memory_space<vmem>>, vector<16x288xbf16>
    %c0_1 = arith.constant 0 : index
    %c0_2 = arith.constant 0 : index
    %1 = vector.load %arg2[%c0_1, %c0_2] : memref<288x128xbf16, #tpu.memory_space<vmem>>, vector<288x128xbf16>
    %cst = arith.constant dense<0.000000e+00> : vector<16x128xf32>
    %2 = tpu.matmul %0, %1, %cst {dimension_numbers = #tpu.dot_dimension_numbers<[1], [0], [0], [1], [0, 0, 1, 1], [], []>} : vector<16x288xbf16>, vector<288x128xbf16>, vector<16x128xf32> -> vector<16x128xf32>
    %c0_3 = arith.constant 0 : index
    %c0_4 = arith.constant 0 : index
    %3 = vector.load %arg3[%c0_3, %c0_4] : memref<1x128xf32, #tpu.memory_space<vmem>>, vector<1x128xf32>
    %4 = vector.broadcast %3 : vector<1x128xf32> to vector<16x128xf32>
    %5 = arith.addf %2, %4 : vector<16x128xf32>
    %cst_5 = arith.constant 0.000000e+00 : f32
    %6 = vector.broadcast %cst_5 : f32 to vector<16x128xf32>
    %7 = arith.maximumf %5, %6 : vector<16x128xf32>
    %8 = arith.truncf %7 : vector<16x128xf32> to vector<16x128xbf16>
    %c0_6 = arith.constant 0 : index
    %c0_7 = arith.constant 0 : index
    %9 = vector.load %arg4[%c0_6, %c0_7] : memref<16x128xbf16, #tpu.memory_space<vmem>>, vector<16x128xbf16>
    tpu.vector_store %arg4[%c0_6, %c0_7], %8 {strides = array<i32>} : memref<16x128xbf16, #tpu.memory_space<vmem>>, vector<16x128xbf16>,
    return
  }
  func.func @transform_0(%arg0: i32) -> (i32, i32) {
    %c0_i32 = arith.constant 0 : i32
    %c0_i32_0 = arith.constant 0 : i32
    return %arg0, %c0_i32 : i32, i32
  }
  func.func @transform_1(%arg0: i32) -> (i32, i32) {
    %c0_i32 = arith.constant 0 : i32
    %c0_i32_0 = arith.constant 0 : i32
    %c0_i32_1 = arith.constant 0 : i32
    return %c0_i32, %c0_i32_0 : i32, i32
  }
  func.func @transform_2(%arg0: i32) -> (i32, i32) {
    %c0_i32 = arith.constant 0 : i32
    %c0_i32_0 = arith.constant 0 : i32
    %c0_i32_1 = arith.constant 0 : i32
    return %c0_i32, %c0_i32_0 : i32, i32
  }
  func.func @transform_3(%arg0: i32) -> (i32, i32) {
    %c0_i32 = arith.constant 0 : i32
    %c0_i32_0 = arith.constant 0 : i32
    return %arg0, %c0_i32 : i32, i32
  }
}

module attributes {stable_mosaic.version = 11 : i64} {
  func.func @_matmul_bias_kernel(%arg0: i32, %arg1: memref<16x576xbf16, #tpu.memory_space<vmem>>, %arg2: memref<576x128xbf16, #tpu.memory_space<vmem>>, %arg3: memref<1x128xf32, #tpu.memory_space<vmem>>, %arg4: memref<16x128xf32, #tpu.memory_space<vmem>>) attributes {dimension_semantics = [#tpu.dimension_semantics<parallel>], iteration_bounds = array<i64: 1>, scalar_prefetch = 0 : i64, scratch_operands = 0 : i64, tpu.core_type = #tpu.core_type<tc>, window_params = [{transform_indices = @transform_0, window_bounds = array<i64: 16, 576>}, {pipeline_mode = #tpu.pipeline_mode<synchronous>, transform_indices = @transform_1, window_bounds = array<i64: 576, 128>}, {pipeline_mode = #tpu.pipeline_mode<synchronous>, transform_indices = @transform_2, window_bounds = array<i64: 1, 128>}, {transform_indices = @transform_3, window_bounds = array<i64: 16, 128>}]} {
    %c0 = arith.constant 0 : index
    %c0_0 = arith.constant 0 : index
    %0 = vector.load %arg1[%c0, %c0_0] : memref<16x576xbf16, #tpu.memory_space<vmem>>, vector<16x576xbf16>
    %c0_1 = arith.constant 0 : index
    %c0_2 = arith.constant 0 : index
    %1 = vector.load %arg2[%c0_1, %c0_2] : memref<576x128xbf16, #tpu.memory_space<vmem>>, vector<576x128xbf16>
    %cst = arith.constant dense<0.000000e+00> : vector<16x128xf32>
    %2 = tpu.matmul %0, %1, %cst {dimension_numbers = #tpu.dot_dimension_numbers<[1], [0], [0], [1], [0, 0, 1, 1], [], []>} : vector<16x576xbf16>, vector<576x128xbf16>, vector<16x128xf32> -> vector<16x128xf32>
    %c0_3 = arith.constant 0 : index
    %c0_4 = arith.constant 0 : index
    %3 = vector.load %arg3[%c0_3, %c0_4] : memref<1x128xf32, #tpu.memory_space<vmem>>, vector<1x128xf32>
    %4 = vector.broadcast %3 : vector<1x128xf32> to vector<16x128xf32>
    %5 = arith.addf %2, %4 : vector<16x128xf32>
    %c0_5 = arith.constant 0 : index
    %c0_6 = arith.constant 0 : index
    %6 = vector.load %arg4[%c0_5, %c0_6] : memref<16x128xf32, #tpu.memory_space<vmem>>, vector<16x128xf32>
    tpu.vector_store %arg4[%c0_5, %c0_6], %5 {strides = array<i32>} : memref<16x128xf32, #tpu.memory_space<vmem>>, vector<16x128xf32>,
    return
  }
  func.func @transform_0(%arg0: i32) -> (i32, i32) {
    %c0_i32 = arith.constant 0 : i32
    %c0_i32_0 = arith.constant 0 : i32
    return %arg0, %c0_i32 : i32, i32
  }
  func.func @transform_1(%arg0: i32) -> (i32, i32) {
    %c0_i32 = arith.constant 0 : i32
    %c0_i32_0 = arith.constant 0 : i32
    %c0_i32_1 = arith.constant 0 : i32
    return %c0_i32, %c0_i32_0 : i32, i32
  }
  func.func @transform_2(%arg0: i32) -> (i32, i32) {
    %c0_i32 = arith.constant 0 : i32
    %c0_i32_0 = arith.constant 0 : i32
    %c0_i32_1 = arith.constant 0 : i32
    return %c0_i32, %c0_i32_0 : i32, i32
  }
  func.func @transform_3(%arg0: i32) -> (i32, i32) {
    %c0_i32 = arith.constant 0 : i32
    %c0_i32_0 = arith.constant 0 : i32
    return %arg0, %c0_i32 : i32, i32
  }
}

module attributes {stable_mosaic.version = 11 : i64} {
  func.func @_matmul_bias_kernel(%arg0: i32, %arg1: memref<16x288xbf16, #tpu.memory_space<vmem>>, %arg2: memref<288x128xbf16, #tpu.memory_space<vmem>>, %arg3: memref<1x128xf32, #tpu.memory_space<vmem>>, %arg4: memref<16x128xf32, #tpu.memory_space<vmem>>) attributes {dimension_semantics = [#tpu.dimension_semantics<parallel>], iteration_bounds = array<i64: 1>, scalar_prefetch = 0 : i64, scratch_operands = 0 : i64, tpu.core_type = #tpu.core_type<tc>, window_params = [{transform_indices = @transform_0, window_bounds = array<i64: 16, 288>}, {pipeline_mode = #tpu.pipeline_mode<synchronous>, transform_indices = @transform_1, window_bounds = array<i64: 288, 128>}, {pipeline_mode = #tpu.pipeline_mode<synchronous>, transform_indices = @transform_2, window_bounds = array<i64: 1, 128>}, {transform_indices = @transform_3, window_bounds = array<i64: 16, 128>}]} {
    %c0 = arith.constant 0 : index
    %c0_0 = arith.constant 0 : index
    %0 = vector.load %arg1[%c0, %c0_0] : memref<16x288xbf16, #tpu.memory_space<vmem>>, vector<16x288xbf16>
    %c0_1 = arith.constant 0 : index
    %c0_2 = arith.constant 0 : index
    %1 = vector.load %arg2[%c0_1, %c0_2] : memref<288x128xbf16, #tpu.memory_space<vmem>>, vector<288x128xbf16>
    %cst = arith.constant dense<0.000000e+00> : vector<16x128xf32>
    %2 = tpu.matmul %0, %1, %cst {dimension_numbers = #tpu.dot_dimension_numbers<[1], [0], [0], [1], [0, 0, 1, 1], [], []>} : vector<16x288xbf16>, vector<288x128xbf16>, vector<16x128xf32> -> vector<16x128xf32>
    %c0_3 = arith.constant 0 : index
    %c0_4 = arith.constant 0 : index
    %3 = vector.load %arg3[%c0_3, %c0_4] : memref<1x128xf32, #tpu.memory_space<vmem>>, vector<1x128xf32>
    %4 = vector.broadcast %3 : vector<1x128xf32> to vector<16x128xf32>
    %5 = arith.addf %2, %4 : vector<16x128xf32>
    %c0_5 = arith.constant 0 : index
    %c0_6 = arith.constant 0 : index
    %6 = vector.load %arg4[%c0_5, %c0_6] : memref<16x128xf32, #tpu.memory_space<vmem>>, vector<16x128xf32>
    tpu.vector_store %arg4[%c0_5, %c0_6], %5 {strides = array<i32>} : memref<16x128xf32, #tpu.memory_space<vmem>>, vector<16x128xf32>,
    return
  }
  func.func @transform_0(%arg0: i32) -> (i32, i32) {
    %c0_i32 = arith.constant 0 : i32
    %c0_i32_0 = arith.constant 0 : i32
    return %arg0, %c0_i32 : i32, i32
  }
  func.func @transform_1(%arg0: i32) -> (i32, i32) {
    %c0_i32 = arith.constant 0 : i32
    %c0_i32_0 = arith.constant 0 : i32
    %c0_i32_1 = arith.constant 0 : i32
    return %c0_i32, %c0_i32_0 : i32, i32
  }
  func.func @transform_2(%arg0: i32) -> (i32, i32) {
    %c0_i32 = arith.constant 0 : i32
    %c0_i32_0 = arith.constant 0 : i32
    %c0_i32_1 = arith.constant 0 : i32
    return %c0_i32, %c0_i32_0 : i32, i32
  }
  func.func @transform_3(%arg0: i32) -> (i32, i32) {
    %c0_i32 = arith.constant 0 : i32
    %c0_i32_0 = arith.constant 0 : i32
    return %arg0, %c0_i32 : i32, i32
  }
}

module attributes {stable_mosaic.version = 11 : i64} {
  func.func @_matmul_bias_kernel(%arg0: i32, %arg1: memref<32x144xbf16, #tpu.memory_space<vmem>>, %arg2: memref<144x128xbf16, #tpu.memory_space<vmem>>, %arg3: memref<1x128xf32, #tpu.memory_space<vmem>>, %arg4: memref<32x128xf32, #tpu.memory_space<vmem>>) attributes {dimension_semantics = [#tpu.dimension_semantics<parallel>], iteration_bounds = array<i64: 1>, scalar_prefetch = 0 : i64, scratch_operands = 0 : i64, tpu.core_type = #tpu.core_type<tc>, window_params = [{transform_indices = @transform_0, window_bounds = array<i64: 32, 144>}, {pipeline_mode = #tpu.pipeline_mode<synchronous>, transform_indices = @transform_1, window_bounds = array<i64: 144, 128>}, {pipeline_mode = #tpu.pipeline_mode<synchronous>, transform_indices = @transform_2, window_bounds = array<i64: 1, 128>}, {transform_indices = @transform_3, window_bounds = array<i64: 32, 128>}]} {
    %c0 = arith.constant 0 : index
    %c0_0 = arith.constant 0 : index
    %0 = vector.load %arg1[%c0, %c0_0] : memref<32x144xbf16, #tpu.memory_space<vmem>>, vector<32x144xbf16>
    %c0_1 = arith.constant 0 : index
    %c0_2 = arith.constant 0 : index
    %1 = vector.load %arg2[%c0_1, %c0_2] : memref<144x128xbf16, #tpu.memory_space<vmem>>, vector<144x128xbf16>
    %cst = arith.constant dense<0.000000e+00> : vector<32x128xf32>
    %2 = tpu.matmul %0, %1, %cst {dimension_numbers = #tpu.dot_dimension_numbers<[1], [0], [0], [1], [0, 0, 1, 1], [], []>} : vector<32x144xbf16>, vector<144x128xbf16>, vector<32x128xf32> -> vector<32x128xf32>
    %c0_3 = arith.constant 0 : index
    %c0_4 = arith.constant 0 : index
    %3 = vector.load %arg3[%c0_3, %c0_4] : memref<1x128xf32, #tpu.memory_space<vmem>>, vector<1x128xf32>
    %4 = vector.broadcast %3 : vector<1x128xf32> to vector<32x128xf32>
    %5 = arith.addf %2, %4 : vector<32x128xf32>
    %c0_5 = arith.constant 0 : index
    %c0_6 = arith.constant 0 : index
    %6 = vector.load %arg4[%c0_5, %c0_6] : memref<32x128xf32, #tpu.memory_space<vmem>>, vector<32x128xf32>
    tpu.vector_store %arg4[%c0_5, %c0_6], %5 {strides = array<i32>} : memref<32x128xf32, #tpu.memory_space<vmem>>, vector<32x128xf32>,
    return
  }
  func.func @transform_0(%arg0: i32) -> (i32, i32) {
    %c0_i32 = arith.constant 0 : i32
    %c0_i32_0 = arith.constant 0 : i32
    return %arg0, %c0_i32 : i32, i32
  }
  func.func @transform_1(%arg0: i32) -> (i32, i32) {
    %c0_i32 = arith.constant 0 : i32
    %c0_i32_0 = arith.constant 0 : i32
    %c0_i32_1 = arith.constant 0 : i32
    return %c0_i32, %c0_i32_0 : i32, i32
  }
  func.func @transform_2(%arg0: i32) -> (i32, i32) {
    %c0_i32 = arith.constant 0 : i32
    %c0_i32_0 = arith.constant 0 : i32
    %c0_i32_1 = arith.constant 0 : i32
    return %c0_i32, %c0_i32_0 : i32, i32
  }
  func.func @transform_3(%arg0: i32) -> (i32, i32) {
    %c0_i32 = arith.constant 0 : i32
    %c0_i32_0 = arith.constant 0 : i32
    return %arg0, %c0_i32 : i32, i32
  }
}

module attributes {stable_mosaic.version = 11 : i64} {
  func.func @_matmul_bias_kernel(%arg0: i32, %arg1: memref<64x72xbf16, #tpu.memory_space<vmem>>, %arg2: memref<72x128xbf16, #tpu.memory_space<vmem>>, %arg3: memref<1x128xf32, #tpu.memory_space<vmem>>, %arg4: memref<64x128xf32, #tpu.memory_space<vmem>>) attributes {dimension_semantics = [#tpu.dimension_semantics<parallel>], iteration_bounds = array<i64: 2>, scalar_prefetch = 0 : i64, scratch_operands = 0 : i64, tpu.core_type = #tpu.core_type<tc>, window_params = [{transform_indices = @transform_0, window_bounds = array<i64: 64, 72>}, {pipeline_mode = #tpu.pipeline_mode<synchronous>, transform_indices = @transform_1, window_bounds = array<i64: 72, 128>}, {pipeline_mode = #tpu.pipeline_mode<synchronous>, transform_indices = @transform_2, window_bounds = array<i64: 1, 128>}, {transform_indices = @transform_3, window_bounds = array<i64: 64, 128>}]} {
    %c0 = arith.constant 0 : index
    %c0_0 = arith.constant 0 : index
    %0 = vector.load %arg1[%c0, %c0_0] : memref<64x72xbf16, #tpu.memory_space<vmem>>, vector<64x72xbf16>
    %c0_1 = arith.constant 0 : index
    %c0_2 = arith.constant 0 : index
    %1 = vector.load %arg2[%c0_1, %c0_2] : memref<72x128xbf16, #tpu.memory_space<vmem>>, vector<72x128xbf16>
    %cst = arith.constant dense<0.000000e+00> : vector<64x128xf32>
    %2 = tpu.matmul %0, %1, %cst {dimension_numbers = #tpu.dot_dimension_numbers<[1], [0], [0], [1], [0, 0, 1, 1], [], []>} : vector<64x72xbf16>, vector<72x128xbf16>, vector<64x128xf32> -> vector<64x128xf32>
    %c0_3 = arith.constant 0 : index
    %c0_4 = arith.constant 0 : index
    %3 = vector.load %arg3[%c0_3, %c0_4] : memref<1x128xf32, #tpu.memory_space<vmem>>, vector<1x128xf32>
    %4 = vector.broadcast %3 : vector<1x128xf32> to vector<64x128xf32>
    %5 = arith.addf %2, %4 : vector<64x128xf32>
    %c0_5 = arith.constant 0 : index
    %c0_6 = arith.constant 0 : index
    %6 = vector.load %arg4[%c0_5, %c0_6] : memref<64x128xf32, #tpu.memory_space<vmem>>, vector<64x128xf32>
    tpu.vector_store %arg4[%c0_5, %c0_6], %5 {strides = array<i32>} : memref<64x128xf32, #tpu.memory_space<vmem>>, vector<64x128xf32>,
    return
  }
  func.func @transform_0(%arg0: i32) -> (i32, i32) {
    %c0_i32 = arith.constant 0 : i32
    %c0_i32_0 = arith.constant 0 : i32
    return %arg0, %c0_i32 : i32, i32
  }
  func.func @transform_1(%arg0: i32) -> (i32, i32) {
    %c0_i32 = arith.constant 0 : i32
    %c0_i32_0 = arith.constant 0 : i32
    %c0_i32_1 = arith.constant 0 : i32
    return %c0_i32, %c0_i32_0 : i32, i32
  }
  func.func @transform_2(%arg0: i32) -> (i32, i32) {
    %c0_i32 = arith.constant 0 : i32
    %c0_i32_0 = arith.constant 0 : i32
    %c0_i32_1 = arith.constant 0 : i32
    return %c0_i32, %c0_i32_0 : i32, i32
  }
  func.func @transform_3(%arg0: i32) -> (i32, i32) {
    %c0_i32 = arith.constant 0 : i32
    %c0_i32_0 = arith.constant 0 : i32
    return %arg0, %c0_i32 : i32, i32
  }
}

</mosaic_0001>

<llo_original>
// kernel: rec_resnet_backbone_forward.9
$region0: #{rec_resnet_backbone_forward.9}
  #allocation0 [shape = 'u32[]', space=smem, size = 0x4, offset = 0x4, fixed_abs, tag = 'smem constant byte address 0x4 - core index']
  #allocation1 [shape = 'u32[72,128]{1,0:T(1,128)}', space=vmem, size = 0x9000, scoped, tag = 'internal scratch']
  %s0 = inlined_call_operand.vmem [shape: bf16[512,27], index: 0, kind: input, shape index: {}]
  %s1 = inlined_call_operand.vmem [shape: bf16[27,128], index: 1, kind: input, shape index: {}]
  %s2 = inlined_call_operand.vmem [shape: f32[1,128], index: 2, kind: input, shape index: {}]
  %s3 = inlined_call_operand.vmem [shape: bf16[512,128], index: 3, kind: output, shape index: {}]
  %s4 = sld [smem:[#allocation0]]
  $region45: #{rec_resnet_backbone_forward.9} parent=0
    _
  %s6 = ssub.s32 1, %s4
  %s7 = scalar_select 0, %s6, %s4
  loop: start=0, step=1, limit=4
  $region2: #{rec_resnet_backbone_forward.9} parent=0 // loop_pre_header
    _
  $region3: #{rec_resnet_backbone_forward.9} parent=0 // loop_header
    %s9 = sphi 0, %s13
    %p10 = scmp.ge.s32.totalorder %s9, 4
    %s19 = sphi 0, %s21
    %s22 = sphi 0, %s19
    %s23 = sphi 0, %s22
    %s39 = sphi 0, %s23
    %s43 = sphi 0, %s43
    %s45 = sphi 0, %s43
    %s46 = sphi 0, %s45
    %s60 = sphi 0, %s46
    %s64 = sphi 0, %s64
    %s66 = sphi 0, %s64
    %s67 = sphi 0, %s66
    %s81 = sphi 0, %s67
    %s87 = sphi 0, %s89
    %s90 = sphi 0, %s87
    %s91 = sphi 0, %s90
    %s107 = sphi 0, %s91
  $region4: #{rec_resnet_backbone_forward.9} parent=0 // loop_header_branch
    %12 = sbr.rel (%p10) target = $region8
  $region5: #{rec_resnet_backbone_forward.9} parent=0 // loop_body
    %s14 = ssub.s32 %s9, 1
    %s15 = ssub.s32 %s9, 2
    %s16 = sadd.s32 %s9, 1
    %s17 = ssub.s32 %s9, %s16
    %p18 = scmp.eq.s32.totalorder %s17, 0
    %s20 = sadd.s32 %s19, 1
    %s21 = scalar_select %p18, %s19, %s20
    %p24 = pneg %p18
    %p25 = scmp.eq.s32.totalorder %s9, 1
    %p26 = por %p24, %p25
    %p27 = scmp.ne.s32.totalorder %s19, %s22
    %p28 = scmp.eq.s32.totalorder %s9, 0
    %p29 = por %p27, %p28
    %p30 = scmp.ne.s32.totalorder %s19, %s22
    %p31 = scmp.eq.s32.totalorder %s14, 1
    %p32 = por %p30, %p31
    %p33 = scmp.ne.s32.totalorder %s22, %s23
    %p34 = scmp.eq.s32.totalorder %s14, 0
    %p35 = por %p33, %p34
    %p36 = scmp.ne.s32.totalorder %s22, %s23
    %p37 = scmp.eq.s32.totalorder %s15, 1
    %p38 = por %p36, %p37
    %p40 = scmp.ne.s32.totalorder %s23, %s39
    %p41 = scmp.eq.s32.totalorder %s15, 0
    %p42 = por %p40, %p41
    %s44 = sadd.s32 %s43, 1
    %p47 = scmp.eq.s32.totalorder %s9, 1
    %p48 = scmp.ne.s32.totalorder %s43, %s45
    %p49 = scmp.eq.s32.totalorder %s9, 0
    %p50 = por %p48, %p49
    %p51 = scmp.ne.s32.totalorder %s43, %s45
    %p52 = scmp.eq.s32.totalorder %s14, 1
    %p53 = por %p51, %p52
    %p54 = scmp.ne.s32.totalorder %s45, %s46
    %p55 = scmp.eq.s32.totalorder %s14, 0
    %p56 = por %p54, %p55
    %p57 = scmp.ne.s32.totalorder %s45, %s46
    %p58 = scmp.eq.s32.totalorder %s15, 1
    %p59 = por %p57, %p58
    %p61 = scmp.ne.s32.totalorder %s46, %s60
    %p62 = scmp.eq.s32.totalorder %s15, 0
    %p63 = por %p61, %p62
    %s65 = sadd.s32 %s64, 1
    %p68 = scmp.eq.s32.totalorder %s9, 1
    %p69 = scmp.ne.s32.totalorder %s64, %s66
    %p70 = scmp.eq.s32.totalorder %s9, 0
    %p71 = por %p69, %p70
    %p72 = scmp.ne.s32.totalorder %s64, %s66
    %p73 = scmp.eq.s32.totalorder %s14, 1
    %p74 = por %p72, %p73
    %p75 = scmp.ne.s32.totalorder %s66, %s67
    %p76 = scmp.eq.s32.totalorder %s14, 0
    %p77 = por %p75, %p76
    %p78 = scmp.ne.s32.totalorder %s66, %s67
    %p79 = scmp.eq.s32.totalorder %s15, 1
    %p80 = por %p78, %p79
    %p82 = scmp.ne.s32.totalorder %s67, %s81
    %p83 = scmp.eq.s32.totalorder %s15, 0
    %p84 = por %p82, %p83
    %s85 = ssub.s32 %s9, %s16
    %p86 = scmp.eq.s32.totalorder %s85, 0
    %s88 = sadd.s32 %s87, 1
    %s89 = scalar_select %p86, %s87, %s88
    %p92 = pneg %p86
    %p93 = scmp.eq.s32.totalorder %s9, 1
    %p94 = por %p92, %p93
    %p95 = scmp.ne.s32.totalorder %s87, %s90
    %p96 = scmp.eq.s32.totalorder %s9, 0
    %p97 = por %p95, %p96
    %p98 = scmp.ne.s32.totalorder %s87, %s90
    %p99 = scmp.eq.s32.totalorder %s14, 1
    %p100 = por %p98, %p99
    %p101 = scmp.ne.s32.totalorder %s90, %s91
    %p102 = scmp.eq.s32.totalorder %s14, 0
    %p103 = por %p101, %p102
    %p104 = scmp.ne.s32.totalorder %s90, %s91
    %p105 = scmp.eq.s32.totalorder %s15, 1
    %p106 = por %p104, %p105
    %p108 = scmp.ne.s32.totalorder %s91, %s107
    %p109 = scmp.eq.s32.totalorder %s15, 0
    %p110 = por %p108, %p109
    %p111 = scmp.le.s32.totalorder 1, %s9
    %p112 = scmp.lt.s32.totalorder %s9, 3
    %p113 = pnand %p111, %p112
    %p114 = pneg %p113
    // Predicated region
    $region9: #{rec_resnet_backbone_forward.9} parent=5 // pred_check
      _
    $region10: #{rec_resnet_backbone_forward.9} parent=5 // pred_check_branch
      %116 = sbr.rel (%p113) target = $region12
    $region11: #{rec_resnet_backbone_forward.9} parent=5 // pred_region
      %s117 = ssub.s32 %s9, 1
      // Predicated region
      $region13: #{rec_resnet_backbone_forward.9} parent=11 // pred_check
        %p118 = pneg %p56
      $region14: #{rec_resnet_backbone_forward.9} parent=11 // pred_check_branch
        %120 = sbr.rel (%p118) target = $region16
      $region15: #{rec_resnet_backbone_forward.9} parent=11 // pred_region
        _
      $region16: #{rec_resnet_backbone_forward.9} parent=11 // pred_fallthru
        _
      // Predicated region
      $region17: #{rec_resnet_backbone_forward.9} parent=11 // pred_check
        %p121 = pneg %p77
      $region18: #{rec_resnet_backbone_forward.9} parent=11 // pred_check_branch
        %123 = sbr.rel (%p121) target = $region20
      $region19: #{rec_resnet_backbone_forward.9} parent=11 // pred_region
        _
      $region20: #{rec_resnet_backbone_forward.9} parent=11 // pred_fallthru
        _
    $region12: #{rec_resnet_backbone_forward.9} parent=5 // pred_fallthru
      _
    %p124 = scmp.lt.s32.totalorder %s9, 2
    // Predicated region
    $region21: #{rec_resnet_backbone_forward.9} parent=5 // pred_check
      %p125 = pneg %p124
    $region22: #{rec_resnet_backbone_forward.9} parent=5 // pred_check_branch
      %127 = sbr.rel (%p125) target = $region24
    $region23: #{rec_resnet_backbone_forward.9} parent=5 // pred_region
      // Predicated region
      $region25: #{rec_resnet_backbone_forward.9} parent=23 // pred_check
        %p128 = pneg %p29
      $region26: #{rec_resnet_backbone_forward.9} parent=23 // pred_check_branch
        %130 = sbr.rel (%p128) target = $region28
      $region27: #{rec_resnet_backbone_forward.9} parent=23 // pred_region
        %s131 = smul.u32 32, %s9
        %p132 = scmp.lt.s32.totalorder %s131, 63
        %s133 = scalar_select %p132, %s131, 63
        %s134 = smul.addr %s133, 4
        %s135 = scalar_lea.vmem %s0, %s134
        %s136 = smul.u32 32, %s9
      $region28: #{rec_resnet_backbone_forward.9} parent=23 // pred_fallthru
        _
    $region24: #{rec_resnet_backbone_forward.9} parent=5 // pred_fallthru
      _
    %p137 = scmp.le.s32.totalorder 1, %s9
    %p138 = scmp.lt.s32.totalorder %s9, 3
    %p139 = pnand %p137, %p138
    %p140 = pneg %p139
    // Predicated region
    $region29: #{rec_resnet_backbone_forward.9} parent=5 // pred_check
      _
    $region30: #{rec_resnet_backbone_forward.9} parent=5 // pred_check_branch
      %142 = sbr.rel (%p139) target = $region32
    $region31: #{rec_resnet_backbone_forward.9} parent=5 // pred_region
      %s143 = ssub.s32 %s9, 1
      %s144 = smul.u32 32, %s14
      %p145 = scmp.lt.s32.totalorder %s144, 63
      %s146 = scalar_select %p145, %s144, 63
      %s147 = smul.addr %s146, 4
      %s148 = scalar_lea.vmem %s0, %s147
      %p149 = pneg %p35
      %p150 = pneg %p32
      %p151 = pneg %p56
      %p152 = pneg %p53
      %p153 = pneg %p77
      %p154 = pneg %p74
      %p155 = pneg %p103
      %p156 = pneg %p100
      %s157 = smul.u32 32, %s14
      %p158 = scmp.lt.s32.totalorder %s157, 63
      %s159 = scalar_select %p158, %s157, 63
      %s160 = smul.addr %s159, 4
      %s161 = scalar_lea.vmem %s3, %s160
      %s162 = smul.u32 32, %s14
      %p163 = scmp.lt.s32.totalorder %s162, 63
      %s164 = scalar_select %p163, %s162, 63
      %s165 = smul.addr %s164, 4
      %s166 = scalar_lea.vmem %s0, %s165
      %s167 = smul.u32 32, %s14
      %s168 = smul.u32 32, %s14
      %p169 = scmp.lt.s32.totalorder %s168, 63
      %s170 = scalar_select %p169, %s168, 63
      %s171 = smul.addr %s170, 4
      %s172 = scalar_lea.vmem %s3, %s171
      %s173 = smul.u32 32, %s14
      %v175 = vld [vmem:[%s166] sm:$0xf]
      %v176 = vld [vmem:[%s166 + $0x4] sm:$0xf]
      %v177 = vld [vmem:[%s166 + $0x8] sm:$0xf]
      %v178 = vld [vmem:[%s166 + $0xc] sm:$0xf]
      %v179 = vld [vmem:[%s166 + $0x10] sm:$0xf]
      %v180 = vld [vmem:[%s166 + $0x14] sm:$0xf]
      %v181 = vld [vmem:[%s166 + $0x18] sm:$0xf]
      %v182 = vld [vmem:[%s166 + $0x1c] sm:$0xf]
      %v183 = vld [vmem:[%s166 + $0x20] sm:$0xf]
      %v184 = vld [vmem:[%s166 + $0x24] sm:$0xf]
      %v185 = vld [vmem:[%s166 + $0x28] sm:$0xf]
      %v186 = vld [vmem:[%s166 + $0x2c] sm:$0xf]
      %v187 = vld [vmem:[%s166 + $0x30] sm:$0xf]
      %v188 = vld [vmem:[%s166 + $0x34] sm:$0xf]
      %v189 = vld [vmem:[%s166 + $0x38] sm:$0xf]
      %v190 = vld [vmem:[%s166 + $0x3c] sm:$0xf]
      %v191 = vld [vmem:[%s166 + $0x40] sm:$0xf]
      %v192 = vld [vmem:[%s166 + $0x44] sm:$0xf]
      %v193 = vld [vmem:[%s166 + $0x48] sm:$0xf]
      %v194 = vld [vmem:[%s166 + $0x4c] sm:$0xf]
      %v195 = vld [vmem:[%s166 + $0x50] sm:$0xf]
      %v196 = vld [vmem:[%s166 + $0x54] sm:$0xf]
      %v197 = vld [vmem:[%s166 + $0x58] sm:$0xf]
      %v198 = vld [vmem:[%s166 + $0x5c] sm:$0xf]
      %v199 = vld [vmem:[%s166 + $0x60] sm:$0xf]
      %v200 = vld [vmem:[%s166 + $0x64] sm:$0xf]
      %v201 = vld [vmem:[%s166 + $0x68] sm:$0xf]
      %v202 = vld [vmem:[%s166 + $0x6c] sm:$0xf]
      %v203 = vld [vmem:[%s166 + $0x70] sm:$0xf]
      %v204 = vld [vmem:[%s166 + $0x74] sm:$0xf]
      %v205 = vld [vmem:[%s166 + $0x78] sm:$0xf]
      %v206 = vld [vmem:[%s166 + $0x7c] sm:$0xf]
      %v207 = vld [vmem:[%s1] sm:$0xf]
      %v208 = vld [vmem:[%s1 + $0x4] sm:$0xf]
      %v209 = vld [vmem:[%s1 + $0x8] sm:$0xf]
      %v210 = vld [vmem:[%s1 + $0xc] sm:$0x3]
      %v211 = vld [vmem:[%s2] sm:$0x1]
      %v213 = vperm.slane %v211, 0
      %v247 = vunpack.c.l.b16 %v175
      %v248 = vunpack.c.l.b16 %v176
      %v249 = vunpack.c.l.b16 %v177
      %v250 = vunpack.c.l.b16 %v178
      %v251 = vunpack.c.l.b16 %v179
      %v252 = vunpack.c.l.b16 %v180
      %v253 = vunpack.c.l.b16 %v181
      %v254 = vunpack.c.l.b16 %v182
      %v255 = vunpack.c.l.b16 %v183
      %v256 = vunpack.c.l.b16 %v184
      %v257 = vunpack.c.l.b16 %v185
      %v258 = vunpack.c.l.b16 %v186
      %v259 = vunpack.c.l.b16 %v187
      %v260 = vunpack.c.l.b16 %v188
      %v261 = vunpack.c.l.b16 %v189
      %v262 = vunpack.c.l.b16 %v190
      %v263 = vunpack.c.l.b16 %v191
      %v264 = vunpack.c.l.b16 %v192
      %v265 = vunpack.c.l.b16 %v193
      %v266 = vunpack.c.l.b16 %v194
      %v267 = vunpack.c.l.b16 %v195
      %v268 = vunpack.c.l.b16 %v196
      %v269 = vunpack.c.l.b16 %v197
      %v270 = vunpack.c.l.b16 %v198
      %v271 = vunpack.c.l.b16 %v199
      %v272 = vunpack.c.l.b16 %v200
      %v273 = vunpack.c.l.b16 %v201
      %v274 = vunpack.c.l.b16 %v202
      %v275 = vunpack.c.l.b16 %v203
      %v276 = vunpack.c.l.b16 %v204
      %v277 = vunpack.c.l.b16 %v205
      %v278 = vunpack.c.l.b16 %v206
      %v279 = vpack.c.b16 %v248, %v247
      %v280 = vpack.c.b16 %v250, %v249
      %v281 = vpack.c.b16 %v252, %v251
      %v282 = vpack.c.b16 %v254, %v253
      %v283 = vpack.c.b16 %v256, %v255
      %v284 = vpack.c.b16 %v258, %v257
      %v285 = vpack.c.b16 %v260, %v259
      %v286 = vpack.c.b16 %v262, %v261
      %v287 = vpack.c.b16 %v264, %v263
      %v288 = vpack.c.b16 %v266, %v265
      %v289 = vpack.c.b16 %v268, %v267
      %v290 = vpack.c.b16 %v270, %v269
      %v291 = vpack.c.b16 %v272, %v271
      %v292 = vpack.c.b16 %v274, %v273
      %v293 = vpack.c.b16 %v276, %v275
      %v294 = vpack.c.b16 %v278, %v277
      %v299 = vunpack.c.l.b16 %v207
      %v300 = vunpack.c.l.b16 %v208
      %v301 = vunpack.c.l.b16 %v209
      %v302 = vunpack.c.l.b16 %v210
      %v303 = vpack.c.b16 %v300, %v299
      %v304 = vpack.c.b16 %v302, %v301
      %vm306 = vcmask 220160
      %v308 = vsel %vm306, %v279, 0
      %v311 = vsel %vm306, %v280, 0
      %v314 = vsel %vm306, %v281, 0
      %v317 = vsel %vm306, %v282, 0
      %v320 = vsel %vm306, %v283, 0
      %v323 = vsel %vm306, %v284, 0
      %v326 = vsel %vm306, %v285, 0
      %v329 = vsel %vm306, %v286, 0
      %v332 = vsel %vm306, %v287, 0
      %v335 = vsel %vm306, %v288, 0
      %v338 = vsel %vm306, %v289, 0
      %v341 = vsel %vm306, %v290, 0
      %v344 = vsel %vm306, %v291, 0
      %v347 = vsel %vm306, %v292, 0
      %v350 = vsel %vm306, %v293, 0
      %v353 = vsel %vm306, %v294, 0
      %vm355 = vcmask 1044480
      %vm356 = vcmask 1045504
      %v357 = vsel %vm355, 4294967295, 65535
      %v358 = vsel %vm356, %v357, 0
      %v360 = vand.u32 %v304, %v358
      %362 = vmatpush.bf16.msra.mxu0 0
      %363 = vmatpush.bf16.msra.mxu0 0
      %364 = vmatpush.bf16.msra.mxu0 0
      %365 = vmatpush.bf16.msra.mxu0 0
      %366 = vmatpush.bf16.msra.mxu0 0
      %367 = vmatpush.bf16.msra.mxu0 0
      %368 = vmatpush.bf16.msra.mxu0 %v360
      %369 = vmatpush.bf16.msra.mxu0 %v303
      %370 = vmatmul.bf16.gmra.mxu0 %v308
      %v371 = vpop.f32.mrf.mxu0
      %v372 = vadd.f32 %v213, %v371
      %v373 = vpop.f32.mrf.mxu0
      %v374 = vadd.f32 %v213, %v373
      %375 = vmatmul.bf16.gmra.mxu0 %v311
      %v376 = vpop.f32.mrf.mxu0
      %v377 = vadd.f32 %v213, %v376
      %v378 = vpop.f32.mrf.mxu0
      %v379 = vadd.f32 %v213, %v378
      %380 = vmatmul.bf16.gmra.mxu0 %v314
      %v381 = vpop.f32.mrf.mxu0
      %v382 = vadd.f32 %v213, %v381
      %v383 = vpop.f32.mrf.mxu0
      %v384 = vadd.f32 %v213, %v383
      %385 = vmatmul.bf16.gmra.mxu0 %v317
      %v386 = vpop.f32.mrf.mxu0
      %v387 = vadd.f32 %v213, %v386
      %v388 = vpop.f32.mrf.mxu0
      %v389 = vadd.f32 %v213, %v388
      %390 = vmatmul.bf16.gmra.mxu0 %v320
      %v391 = vpop.f32.mrf.mxu0
      %v392 = vadd.f32 %v213, %v391
      %v393 = vpop.f32.mrf.mxu0
      %v394 = vadd.f32 %v213, %v393
      %395 = vmatmul.bf16.gmra.mxu0 %v323
      %v396 = vpop.f32.mrf.mxu0
      %v397 = vadd.f32 %v213, %v396
      %v398 = vpop.f32.mrf.mxu0
      %v399 = vadd.f32 %v213, %v398
      %400 = vmatmul.bf16.gmra.mxu0 %v326
      %v401 = vpop.f32.mrf.mxu0
      %v402 = vadd.f32 %v213, %v401
      %v403 = vpop.f32.mrf.mxu0
      %v404 = vadd.f32 %v213, %v403
      %405 = vmatmul.bf16.gmra.mxu0 %v329
      %v406 = vpop.f32.mrf.mxu0
      %v407 = vadd.f32 %v213, %v406
      %v408 = vpop.f32.mrf.mxu0
      %v409 = vadd.f32 %v213, %v408
      %410 = vmatmul.bf16.gmra.mxu0 %v332
      %v411 = vpop.f32.mrf.mxu0
      %v412 = vadd.f32 %v213, %v411
      %v413 = vpop.f32.mrf.mxu0
      %v414 = vadd.f32 %v213, %v413
      %415 = vmatmul.bf16.gmra.mxu0 %v335
      %v416 = vpop.f32.mrf.mxu0
      %v417 = vadd.f32 %v213, %v416
      %v418 = vpop.f32.mrf.mxu0
      %v419 = vadd.f32 %v213, %v418
      %420 = vmatmul.bf16.gmra.mxu0 %v338
      %v421 = vpop.f32.mrf.mxu0
      %v422 = vadd.f32 %v213, %v421
      %v423 = vpop.f32.mrf.mxu0
      %v424 = vadd.f32 %v213, %v423
      %425 = vmatmul.bf16.gmra.mxu0 %v341
      %v426 = vpop.f32.mrf.mxu0
      %v427 = vadd.f32 %v213, %v426
      %v428 = vpop.f32.mrf.mxu0
      %v429 = vadd.f32 %v213, %v428
      %430 = vmatmul.bf16.gmra.mxu0 %v344
      %v431 = vpop.f32.mrf.mxu0
      %v432 = vadd.f32 %v213, %v431
      %v433 = vpop.f32.mrf.mxu0
      %v434 = vadd.f32 %v213, %v433
      %435 = vmatmul.bf16.gmra.mxu0 %v347
      %v436 = vpop.f32.mrf.mxu0
      %v437 = vadd.f32 %v213, %v436
      %v438 = vpop.f32.mrf.mxu0
      %v439 = vadd.f32 %v213, %v438
      %440 = vmatmul.bf16.gmra.mxu0 %v350
      %v441 = vpop.f32.mrf.mxu0
      %v442 = vadd.f32 %v213, %v441
      %v443 = vpop.f32.mrf.mxu0
      %v444 = vadd.f32 %v213, %v443
      %445 = vmatmul.bf16.gmra.mxu0 %v353
      %v446 = vpop.f32.mrf.mxu0
      %v447 = vadd.f32 %v213, %v446
      %v448 = vpop.f32.mrf.mxu0
      %v449 = vadd.f32 %v213, %v448
      %450 = vdwg.mxu0
      %v451 = vmax.f32 %v372, 0.0
      %v452 = vmax.f32 %v374, 0.0
      %v453 = vmax.f32 %v377, 0.0
      %v454 = vmax.f32 %v379, 0.0
      %v455 = vmax.f32 %v382, 0.0
      %v456 = vmax.f32 %v384, 0.0
      %v457 = vmax.f32 %v387, 0.0
      %v458 = vmax.f32 %v389, 0.0
      %v459 = vmax.f32 %v392, 0.0
      %v460 = vmax.f32 %v394, 0.0
      %v461 = vmax.f32 %v397, 0.0
      %v462 = vmax.f32 %v399, 0.0
      %v463 = vmax.f32 %v402, 0.0
      %v464 = vmax.f32 %v404, 0.0
      %v465 = vmax.f32 %v407, 0.0
      %v466 = vmax.f32 %v409, 0.0
      %v467 = vmax.f32 %v412, 0.0
      %v468 = vmax.f32 %v414, 0.0
      %v469 = vmax.f32 %v417, 0.0
      %v470 = vmax.f32 %v419, 0.0
      %v471 = vmax.f32 %v422, 0.0
      %v472 = vmax.f32 %v424, 0.0
      %v473 = vmax.f32 %v427, 0.0
      %v474 = vmax.f32 %v429, 0.0
      %v475 = vmax.f32 %v432, 0.0
      %v476 = vmax.f32 %v434, 0.0
      %v477 = vmax.f32 %v437, 0.0
      %v478 = vmax.f32 %v439, 0.0
      %v479 = vmax.f32 %v442, 0.0
      %v480 = vmax.f32 %v444, 0.0
      %v481 = vmax.f32 %v447, 0.0
      %v482 = vmax.f32 %v449, 0.0
      %v483 = vpack.c.bf16 %v451, %v451
      %v484 = vpack.c.bf16 %v452, %v452
      %v485 = vpack.c.bf16 %v453, %v453
      %v486 = vpack.c.bf16 %v454, %v454
      %v487 = vpack.c.bf16 %v455, %v455
      %v488 = vpack.c.bf16 %v456, %v456
      %v489 = vpack.c.bf16 %v457, %v457
      %v490 = vpack.c.bf16 %v458, %v458
      %v491 = vpack.c.bf16 %v459, %v459
      %v492 = vpack.c.bf16 %v460, %v460
      %v493 = vpack.c.bf16 %v461, %v461
      %v494 = vpack.c.bf16 %v462, %v462
      %v495 = vpack.c.bf16 %v463, %v463
      %v496 = vpack.c.bf16 %v464, %v464
      %v497 = vpack.c.bf16 %v465, %v465
      %v498 = vpack.c.bf16 %v466, %v466
      %v499 = vpack.c.bf16 %v467, %v467
      %v500 = vpack.c.bf16 %v468, %v468
      %v501 = vpack.c.bf16 %v469, %v469
      %v502 = vpack.c.bf16 %v470, %v470
      %v503 = vpack.c.bf16 %v471, %v471
      %v504 = vpack.c.bf16 %v472, %v472
      %v505 = vpack.c.bf16 %v473, %v473
      %v506 = vpack.c.bf16 %v474, %v474
      %v507 = vpack.c.bf16 %v475, %v475
      %v508 = vpack.c.bf16 %v476, %v476
      %v509 = vpack.c.bf16 %v477, %v477
      %v510 = vpack.c.bf16 %v478, %v478
      %v511 = vpack.c.bf16 %v479, %v479
      %v512 = vpack.c.bf16 %v480, %v480
      %v513 = vpack.c.bf16 %v481, %v481
      %v514 = vpack.c.bf16 %v482, %v482
      %515 = vst [vmem:[%s172] sm:$0xf] %v483
      %516 = vst [vmem:[%s172 + $0x4] sm:$0xf] %v484
      %517 = vst [vmem:[%s172 + $0x8] sm:$0xf] %v485
      %518 = vst [vmem:[%s172 + $0xc] sm:$0xf] %v486
      %519 = vst [vmem:[%s172 + $0x10] sm:$0xf] %v487
      %520 = vst [vmem:[%s172 + $0x14] sm:$0xf] %v488
      %521 = vst [vmem:[%s172 + $0x18] sm:$0xf] %v489
      %522 = vst [vmem:[%s172 + $0x1c] sm:$0xf] %v490
      %523 = vst [vmem:[%s172 + $0x20] sm:$0xf] %v491
      %524 = vst [vmem:[%s172 + $0x24] sm:$0xf] %v492
      %525 = vst [vmem:[%s172 + $0x28] sm:$0xf] %v493
      %526 = vst [vmem:[%s172 + $0x2c] sm:$0xf] %v494
      %527 = vst [vmem:[%s172 + $0x30] sm:$0xf] %v495
      %528 = vst [vmem:[%s172 + $0x34] sm:$0xf] %v496
      %529 = vst [vmem:[%s172 + $0x38] sm:$0xf] %v497
      %530 = vst [vmem:[%s172 + $0x3c] sm:$0xf] %v498
      %531 = vst [vmem:[%s172 + $0x40] sm:$0xf] %v499
      %532 = vst [vmem:[%s172 + $0x44] sm:$0xf] %v500
      %533 = vst [vmem:[%s172 + $0x48] sm:$0xf] %v501
      %534 = vst [vmem:[%s172 + $0x4c] sm:$0xf] %v502
      %535 = vst [vmem:[%s172 + $0x50] sm:$0xf] %v503
      %536 = vst [vmem:[%s172 + $0x54] sm:$0xf] %v504
      %537 = vst [vmem:[%s172 + $0x58] sm:$0xf] %v505
      %538 = vst [vmem:[%s172 + $0x5c] sm:$0xf] %v506
      %539 = vst [vmem:[%s172 + $0x60] sm:$0xf] %v507
      %540 = vst [vmem:[%s172 + $0x64] sm:$0xf] %v508
      %541 = vst [vmem:[%s172 + $0x68] sm:$0xf] %v509
      %542 = vst [vmem:[%s172 + $0x6c] sm:$0xf] %v510
      %543 = vst [vmem:[%s172 + $0x70] sm:$0xf] %v511
      %544 = vst [vmem:[%s172 + $0x74] sm:$0xf] %v512
      %545 = vst [vmem:[%s172 + $0x78] sm:$0xf] %v513
      %546 = vst [vmem:[%s172 + $0x7c] sm:$0xf] %v514
      %s547 = smul.u32 32, %s14
      %p548 = scmp.lt.s32.totalorder %s547, 63
      %s549 = scalar_select %p548, %s547, 63
      %s550 = smul.addr %s549, 4
      %s551 = scalar_lea.vmem %s3, %s550
      // Predicated region
      $region33: #{rec_resnet_backbone_forward.9} parent=31 // pred_check
        %p552 = pneg %p100
      $region34: #{rec_resnet_backbone_forward.9} parent=31 // pred_check_branch
        %554 = sbr.rel (%p552) target = $region36
      $region35: #{rec_resnet_backbone_forward.9} parent=31 // pred_region
        %s555 = smul.u32 32, %s14
      $region36: #{rec_resnet_backbone_forward.9} parent=31 // pred_fallthru
        _
    $region32: #{rec_resnet_backbone_forward.9} parent=5 // pred_fallthru
      _
    %p556 = scmp.le.s32.totalorder 2, %s9
    // Predicated region
    $region37: #{rec_resnet_backbone_forward.9} parent=5 // pred_check
      %p557 = pneg %p556
    $region38: #{rec_resnet_backbone_forward.9} parent=5 // pred_check_branch
      %559 = sbr.rel (%p557) target = $region40
    $region39: #{rec_resnet_backbone_forward.9} parent=5 // pred_region
      %s560 = ssub.s32 %s9, 2
      // Predicated region
      $region41: #{rec_resnet_backbone_forward.9} parent=39 // pred_check
        %p561 = pneg %p106
      $region42: #{rec_resnet_backbone_forward.9} parent=39 // pred_check_branch
        %563 = sbr.rel (%p561) target = $region44
      $region43: #{rec_resnet_backbone_forward.9} parent=39 // pred_region
        %s564 = smul.u32 32, %s15
        %p565 = scmp.lt.s32.totalorder %s564, 63
        %s566 = scalar_select %p565, %s564, 63
        %s567 = smul.addr %s566, 4
        %s568 = scalar_lea.vmem %s3, %s567
      $region44: #{rec_resnet_backbone_forward.9} parent=39 // pred_fallthru
        _
    $region40: #{rec_resnet_backbone_forward.9} parent=5 // pred_fallthru
      _
  $region6: #{rec_resnet_backbone_forward.9} parent=0 // loop_footer
    %s13 = sadd.s32 1, %s9
  $region7: #{rec_resnet_backbone_forward.9} parent=0 // loop_footer_branch
    %8 = sbr.rel target = $region3
  $region8: #{rec_resnet_backbone_forward.9} parent=0 // loop_exit
    _

// kernel: rec_resnet_backbone_forward.10
$region0: #{rec_resnet_backbone_forward.10}
  #allocation0 [shape = 'u32[]', space=smem, size = 0x4, offset = 0x4, fixed_abs, tag = 'smem constant byte address 0x4 - core index']
  #allocation1 [shape = 'u32[72,128]{1,0:T(1,128)}', space=vmem, size = 0x9000, scoped, tag = 'internal scratch']
  %s0 = inlined_call_operand.vmem [shape: bf16[128,72], index: 0, kind: input, shape index: {}]
  %s1 = inlined_call_operand.vmem [shape: bf16[72,128], index: 1, kind: input, shape index: {}]
  %s2 = inlined_call_operand.vmem [shape: f32[1,128], index: 2, kind: input, shape index: {}]
  %s3 = inlined_call_operand.vmem [shape: bf16[128,128], index: 3, kind: output, shape index: {}]
  %s4 = sld [smem:[#allocation0]]
  $region45: #{rec_resnet_backbone_forward.10} parent=0
    _
  %s6 = ssub.s32 1, %s4
  %s7 = scalar_select 0, %s6, %s4
  loop: start=0, step=1, limit=4
  $region2: #{rec_resnet_backbone_forward.10} parent=0 // loop_pre_header
    _
  $region3: #{rec_resnet_backbone_forward.10} parent=0 // loop_header
    %s9 = sphi 0, %s13
    %p10 = scmp.ge.s32.totalorder %s9, 4
    %s19 = sphi 0, %s21
    %s22 = sphi 0, %s19
    %s23 = sphi 0, %s22
    %s39 = sphi 0, %s23
    %s43 = sphi 0, %s43
    %s45 = sphi 0, %s43
    %s46 = sphi 0, %s45
    %s60 = sphi 0, %s46
    %s64 = sphi 0, %s64
    %s66 = sphi 0, %s64
    %s67 = sphi 0, %s66
    %s81 = sphi 0, %s67
    %s87 = sphi 0, %s89
    %s90 = sphi 0, %s87
    %s91 = sphi 0, %s90
    %s107 = sphi 0, %s91
  $region4: #{rec_resnet_backbone_forward.10} parent=0 // loop_header_branch
    %12 = sbr.rel (%p10) target = $region8
  $region5: #{rec_resnet_backbone_forward.10} parent=0 // loop_body
    %s14 = ssub.s32 %s9, 1
    %s15 = ssub.s32 %s9, 2
    %s16 = sadd.s32 %s9, 1
    %s17 = ssub.s32 %s9, %s16
    %p18 = scmp.eq.s32.totalorder %s17, 0
    %s20 = sadd.s32 %s19, 1
    %s21 = scalar_select %p18, %s19, %s20
    %p24 = pneg %p18
    %p25 = scmp.eq.s32.totalorder %s9, 1
    %p26 = por %p24, %p25
    %p27 = scmp.ne.s32.totalorder %s19, %s22
    %p28 = scmp.eq.s32.totalorder %s9, 0
    %p29 = por %p27, %p28
    %p30 = scmp.ne.s32.totalorder %s19, %s22
    %p31 = scmp.eq.s32.totalorder %s14, 1
    %p32 = por %p30, %p31
    %p33 = scmp.ne.s32.totalorder %s22, %s23
    %p34 = scmp.eq.s32.totalorder %s14, 0
    %p35 = por %p33, %p34
    %p36 = scmp.ne.s32.totalorder %s22, %s23
    %p37 = scmp.eq.s32.totalorder %s15, 1
    %p38 = por %p36, %p37
    %p40 = scmp.ne.s32.totalorder %s23, %s39
    %p41 = scmp.eq.s32.totalorder %s15, 0
    %p42 = por %p40, %p41
    %s44 = sadd.s32 %s43, 1
    %p47 = scmp.eq.s32.totalorder %s9, 1
    %p48 = scmp.ne.s32.totalorder %s43, %s45
    %p49 = scmp.eq.s32.totalorder %s9, 0
    %p50 = por %p48, %p49
    %p51 = scmp.ne.s32.totalorder %s43, %s45
    %p52 = scmp.eq.s32.totalorder %s14, 1
    %p53 = por %p51, %p52
    %p54 = scmp.ne.s32.totalorder %s45, %s46
    %p55 = scmp.eq.s32.totalorder %s14, 0
    %p56 = por %p54, %p55
    %p57 = scmp.ne.s32.totalorder %s45, %s46
    %p58 = scmp.eq.s32.totalorder %s15, 1
    %p59 = por %p57, %p58
    %p61 = scmp.ne.s32.totalorder %s46, %s60
    %p62 = scmp.eq.s32.totalorder %s15, 0
    %p63 = por %p61, %p62
    %s65 = sadd.s32 %s64, 1
    %p68 = scmp.eq.s32.totalorder %s9, 1
    %p69 = scmp.ne.s32.totalorder %s64, %s66
    %p70 = scmp.eq.s32.totalorder %s9, 0
    %p71 = por %p69, %p70
    %p72 = scmp.ne.s32.totalorder %s64, %s66
    %p73 = scmp.eq.s32.totalorder %s14, 1
    %p74 = por %p72, %p73
    %p75 = scmp.ne.s32.totalorder %s66, %s67
    %p76 = scmp.eq.s32.totalorder %s14, 0
    %p77 = por %p75, %p76
    %p78 = scmp.ne.s32.totalorder %s66, %s67
    %p79 = scmp.eq.s32.totalorder %s15, 1
    %p80 = por %p78, %p79
    %p82 = scmp.ne.s32.totalorder %s67, %s81
    %p83 = scmp.eq.s32.totalorder %s15, 0
    %p84 = por %p82, %p83
    %s85 = ssub.s32 %s9, %s16
    %p86 = scmp.eq.s32.totalorder %s85, 0
    %s88 = sadd.s32 %s87, 1
    %s89 = scalar_select %p86, %s87, %s88
    %p92 = pneg %p86
    %p93 = scmp.eq.s32.totalorder %s9, 1
    %p94 = por %p92, %p93
    %p95 = scmp.ne.s32.totalorder %s87, %s90
    %p96 = scmp.eq.s32.totalorder %s9, 0
    %p97 = por %p95, %p96
    %p98 = scmp.ne.s32.totalorder %s87, %s90
    %p99 = scmp.eq.s32.totalorder %s14, 1
    %p100 = por %p98, %p99
    %p101 = scmp.ne.s32.totalorder %s90, %s91
    %p102 = scmp.eq.s32.totalorder %s14, 0
    %p103 = por %p101, %p102
    %p104 = scmp.ne.s32.totalorder %s90, %s91
    %p105 = scmp.eq.s32.totalorder %s15, 1
    %p106 = por %p104, %p105
    %p108 = scmp.ne.s32.totalorder %s91, %s107
    %p109 = scmp.eq.s32.totalorder %s15, 0
    %p110 = por %p108, %p109
    %p111 = scmp.le.s32.totalorder 1, %s9
    %p112 = scmp.lt.s32.totalorder %s9, 3
    %p113 = pnand %p111, %p112
    %p114 = pneg %p113
    // Predicated region
    $region9: #{rec_resnet_backbone_forward.10} parent=5 // pred_check
      _
    $region10: #{rec_resnet_backbone_forward.10} parent=5 // pred_check_branch
      %116 = sbr.rel (%p113) target = $region12
    $region11: #{rec_resnet_backbone_forward.10} parent=5 // pred_region
      %s117 = ssub.s32 %s9, 1
      // Predicated region
      $region13: #{rec_resnet_backbone_forward.10} parent=11 // pred_check
        %p118 = pneg %p56
      $region14: #{rec_resnet_backbone_forward.10} parent=11 // pred_check_branch
        %120 = sbr.rel (%p118) target = $region16
      $region15: #{rec_resnet_backbone_forward.10} parent=11 // pred_region
        _
      $region16: #{rec_resnet_backbone_forward.10} parent=11 // pred_fallthru
        _
      // Predicated region
      $region17: #{rec_resnet_backbone_forward.10} parent=11 // pred_check
        %p121 = pneg %p77
      $region18: #{rec_resnet_backbone_forward.10} parent=11 // pred_check_branch
        %123 = sbr.rel (%p121) target = $region20
      $region19: #{rec_resnet_backbone_forward.10} parent=11 // pred_region
        _
      $region20: #{rec_resnet_backbone_forward.10} parent=11 // pred_fallthru
        _
    $region12: #{rec_resnet_backbone_forward.10} parent=5 // pred_fallthru
      _
    %p124 = scmp.lt.s32.totalorder %s9, 2
    // Predicated region
    $region21: #{rec_resnet_backbone_forward.10} parent=5 // pred_check
      %p125 = pneg %p124
    $region22: #{rec_resnet_backbone_forward.10} parent=5 // pred_check_branch
      %127 = sbr.rel (%p125) target = $region24
    $region23: #{rec_resnet_backbone_forward.10} parent=5 // pred_region
      // Predicated region
      $region25: #{rec_resnet_backbone_forward.10} parent=23 // pred_check
        %p128 = pneg %p29
      $region26: #{rec_resnet_backbone_forward.10} parent=23 // pred_check_branch
        %130 = sbr.rel (%p128) target = $region28
      $region27: #{rec_resnet_backbone_forward.10} parent=23 // pred_region
        %s131 = smul.u32 8, %s9
        %p132 = scmp.lt.s32.totalorder %s131, 15
        %s133 = scalar_select %p132, %s131, 15
        %s134 = smul.addr %s133, 4
        %s135 = scalar_lea.vmem %s0, %s134
        %s136 = smul.u32 8, %s9
      $region28: #{rec_resnet_backbone_forward.10} parent=23 // pred_fallthru
        _
    $region24: #{rec_resnet_backbone_forward.10} parent=5 // pred_fallthru
      _
    %p137 = scmp.le.s32.totalorder 1, %s9
    %p138 = scmp.lt.s32.totalorder %s9, 3
    %p139 = pnand %p137, %p138
    %p140 = pneg %p139
    // Predicated region
    $region29: #{rec_resnet_backbone_forward.10} parent=5 // pred_check
      _
    $region30: #{rec_resnet_backbone_forward.10} parent=5 // pred_check_branch
      %142 = sbr.rel (%p139) target = $region32
    $region31: #{rec_resnet_backbone_forward.10} parent=5 // pred_region
      %s143 = ssub.s32 %s9, 1
      %s144 = smul.u32 8, %s14
      %p145 = scmp.lt.s32.totalorder %s144, 15
      %s146 = scalar_select %p145, %s144, 15
      %s147 = smul.addr %s146, 4
      %s148 = scalar_lea.vmem %s0, %s147
      %p149 = pneg %p35
      %p150 = pneg %p32
      %p151 = pneg %p56
      %p152 = pneg %p53
      %p153 = pneg %p77
      %p154 = pneg %p74
      %p155 = pneg %p103
      %p156 = pneg %p100
      %s157 = smul.u32 8, %s14
      %p158 = scmp.lt.s32.totalorder %s157, 15
      %s159 = scalar_select %p158, %s157, 15
      %s160 = smul.addr %s159, 4
      %s161 = scalar_lea.vmem %s3, %s160
      %s162 = smul.u32 8, %s14
      %p163 = scmp.lt.s32.totalorder %s162, 15
      %s164 = scalar_select %p163, %s162, 15
      %s165 = smul.addr %s164, 4
      %s166 = scalar_lea.vmem %s0, %s165
      %s167 = smul.u32 8, %s14
      %s168 = smul.u32 8, %s14
      %p169 = scmp.lt.s32.totalorder %s168, 15
      %s170 = scalar_select %p169, %s168, 15
      %s171 = smul.addr %s170, 4
      %s172 = scalar_lea.vmem %s3, %s171
      %s173 = smul.u32 8, %s14
      %v175 = vld [vmem:[%s166] sm:$0xf]
      %v176 = vld [vmem:[%s166 + $0x4] sm:$0xf]
      %v177 = vld [vmem:[%s166 + $0x8] sm:$0xf]
      %v178 = vld [vmem:[%s166 + $0xc] sm:$0xf]
      %v179 = vld [vmem:[%s166 + $0x10] sm:$0xf]
      %v180 = vld [vmem:[%s166 + $0x14] sm:$0xf]
      %v181 = vld [vmem:[%s166 + $0x18] sm:$0xf]
      %v182 = vld [vmem:[%s166 + $0x1c] sm:$0xf]
      %v183 = vld [vmem:[%s1] sm:$0xf]
      %v184 = vld [vmem:[%s1 + $0x4] sm:$0xf]
      %v185 = vld [vmem:[%s1 + $0x8] sm:$0xf]
      %v186 = vld [vmem:[%s1 + $0xc] sm:$0xf]
      %v187 = vld [vmem:[%s1 + $0x10] sm:$0xf]
      %v188 = vld [vmem:[%s1 + $0x14] sm:$0xf]
      %v189 = vld [vmem:[%s1 + $0x18] sm:$0xf]
      %v190 = vld [vmem:[%s1 + $0x1c] sm:$0xf]
      %v191 = vld [vmem:[%s1 + $0x20] sm:$0xf]
      %v192 = vld [vmem:[%s2] sm:$0x1]
      %v194 = vperm.slane %v192, 0
      %v204 = vunpack.c.l.b16 %v175
      %v205 = vunpack.c.l.b16 %v176
      %v206 = vunpack.c.l.b16 %v177
      %v207 = vunpack.c.l.b16 %v178
      %v208 = vunpack.c.l.b16 %v179
      %v209 = vunpack.c.l.b16 %v180
      %v210 = vunpack.c.l.b16 %v181
      %v211 = vunpack.c.l.b16 %v182
      %v212 = vpack.c.b16 %v205, %v204
      %v213 = vpack.c.b16 %v207, %v206
      %v214 = vpack.c.b16 %v209, %v208
      %v215 = vpack.c.b16 %v211, %v210
      %v225 = vunpack.c.l.b16 %v183
      %v226 = vunpack.c.l.b16 %v184
      %v227 = vunpack.c.l.b16 %v185
      %v228 = vunpack.c.l.b16 %v186
      %v229 = vunpack.c.l.b16 %v187
      %v230 = vunpack.c.l.b16 %v188
      %v231 = vunpack.c.l.b16 %v189
      %v232 = vunpack.c.l.b16 %v190
      %v233 = vunpack.c.l.b16 %v191
      %v234 = vpack.c.b16 %v226, %v225
      %v235 = vpack.c.b16 %v228, %v227
      %v236 = vpack.c.b16 %v230, %v229
      %v237 = vpack.c.b16 %v232, %v231
      %v238 = vpack.c.b16 %v233, %v233
      %vm243 = vcmask 588800
      %v245 = vsel %vm243, %v212, 0
      %v248 = vsel %vm243, %v213, 0
      %v251 = vsel %vm243, %v214, 0
      %v254 = vsel %vm243, %v215, 0
      %vm256 = vcmask 1043456
      %v258 = vsel %vm256, %v238, 0
      %260 = vmatpush.bf16.msra.mxu0 0
      %261 = vmatpush.bf16.msra.mxu0 0
      %262 = vmatpush.bf16.msra.mxu0 0
      %263 = vmatpush.bf16.msra.mxu0 %v258
      %264 = vmatpush.bf16.msra.mxu0 %v237
      %265 = vmatpush.bf16.msra.mxu0 %v236
      %266 = vmatpush.bf16.msra.mxu0 %v235
      %267 = vmatpush.bf16.msra.mxu0 %v234
      %268 = vmatmul.bf16.gmra.mxu0 %v245
      %v269 = vpop.f32.mrf.mxu0
      %v270 = vadd.f32 %v194, %v269
      %v271 = vpop.f32.mrf.mxu0
      %v272 = vadd.f32 %v194, %v271
      %273 = vmatmul.bf16.gmra.mxu0 %v248
      %v274 = vpop.f32.mrf.mxu0
      %v275 = vadd.f32 %v194, %v274
      %v276 = vpop.f32.mrf.mxu0
      %v277 = vadd.f32 %v194, %v276
      %278 = vmatmul.bf16.gmra.mxu0 %v251
      %v279 = vpop.f32.mrf.mxu0
      %v280 = vadd.f32 %v194, %v279
      %v281 = vpop.f32.mrf.mxu0
      %v282 = vadd.f32 %v194, %v281
      %283 = vmatmul.bf16.gmra.mxu0 %v254
      %v284 = vpop.f32.mrf.mxu0
      %v285 = vadd.f32 %v194, %v284
      %v286 = vpop.f32.mrf.mxu0
      %v287 = vadd.f32 %v194, %v286
      %288 = vdwg.mxu0
      %v289 = vmax.f32 %v270, 0.0
      %v290 = vmax.f32 %v272, 0.0
      %v291 = vmax.f32 %v275, 0.0
      %v292 = vmax.f32 %v277, 0.0
      %v293 = vmax.f32 %v280, 0.0
      %v294 = vmax.f32 %v282, 0.0
      %v295 = vmax.f32 %v285, 0.0
      %v296 = vmax.f32 %v287, 0.0
      %v297 = vpack.c.bf16 %v289, %v289
      %v298 = vpack.c.bf16 %v290, %v290
      %v299 = vpack.c.bf16 %v291, %v291
      %v300 = vpack.c.bf16 %v292, %v292
      %v301 = vpack.c.bf16 %v293, %v293
      %v302 = vpack.c.bf16 %v294, %v294
      %v303 = vpack.c.bf16 %v295, %v295
      %v304 = vpack.c.bf16 %v296, %v296
      %305 = vst [vmem:[%s172] sm:$0xf] %v297
      %306 = vst [vmem:[%s172 + $0x4] sm:$0xf] %v298
      %307 = vst [vmem:[%s172 + $0x8] sm:$0xf] %v299
      %308 = vst [vmem:[%s172 + $0xc] sm:$0xf] %v300
      %309 = vst [vmem:[%s172 + $0x10] sm:$0xf] %v301
      %310 = vst [vmem:[%s172 + $0x14] sm:$0xf] %v302
      %311 = vst [vmem:[%s172 + $0x18] sm:$0xf] %v303
      %312 = vst [vmem:[%s172 + $0x1c] sm:$0xf] %v304
      %s313 = smul.u32 8, %s14
      %p314 = scmp.lt.s32.totalorder %s313, 15
      %s315 = scalar_select %p314, %s313, 15
      %s316 = smul.addr %s315, 4
      %s317 = scalar_lea.vmem %s3, %s316
      // Predicated region
      $region33: #{rec_resnet_backbone_forward.10} parent=31 // pred_check
        %p318 = pneg %p100
      $region34: #{rec_resnet_backbone_forward.10} parent=31 // pred_check_branch
        %320 = sbr.rel (%p318) target = $region36
      $region35: #{rec_resnet_backbone_forward.10} parent=31 // pred_region
        %s321 = smul.u32 8, %s14
      $region36: #{rec_resnet_backbone_forward.10} parent=31 // pred_fallthru
        _
    $region32: #{rec_resnet_backbone_forward.10} parent=5 // pred_fallthru
      _
    %p322 = scmp.le.s32.totalorder 2, %s9
    // Predicated region
    $region37: #{rec_resnet_backbone_forward.10} parent=5 // pred_check
      %p323 = pneg %p322
    $region38: #{rec_resnet_backbone_forward.10} parent=5 // pred_check_branch
      %325 = sbr.rel (%p323) target = $region40
    $region39: #{rec_resnet_backbone_forward.10} parent=5 // pred_region
      %s326 = ssub.s32 %s9, 2
      // Predicated region
      $region41: #{rec_resnet_backbone_forward.10} parent=39 // pred_check
        %p327 = pneg %p106
      $region42: #{rec_resnet_backbone_forward.10} parent=39 // pred_check_branch
        %329 = sbr.rel (%p327) target = $region44
      $region43: #{rec_resnet_backbone_forward.10} parent=39 // pred_region
        %s330 = smul.u32 8, %s15
        %p331 = scmp.lt.s32.totalorder %s330, 15
        %s332 = scalar_select %p331, %s330, 15
        %s333 = smul.addr %s332, 4
        %s334 = scalar_lea.vmem %s3, %s333
      $region44: #{rec_resnet_backbone_forward.10} parent=39 // pred_fallthru
        _
    $region40: #{rec_resnet_backbone_forward.10} parent=5 // pred_fallthru
      _
  $region6: #{rec_resnet_backbone_forward.10} parent=0 // loop_footer
    %s13 = sadd.s32 1, %s9
  $region7: #{rec_resnet_backbone_forward.10} parent=0 // loop_footer_branch
    %8 = sbr.rel target = $region3
  $region8: #{rec_resnet_backbone_forward.10} parent=0 // loop_exit
    _

// kernel: rec_resnet_backbone_forward.11
$region0: #{rec_resnet_backbone_forward.11}
  #allocation0 [shape = 'u32[]', space=smem, size = 0x4, offset = 0x4, fixed_abs, tag = 'smem constant byte address 0x4 - core index']
  #allocation1 [shape = 'u32[72,128]{1,0:T(1,128)}', space=vmem, size = 0x9000, scoped, tag = 'internal scratch']
  %s0 = inlined_call_operand.vmem [shape: bf16[32,72], index: 0, kind: input, shape index: {}]
  %s1 = inlined_call_operand.vmem [shape: bf16[72,128], index: 1, kind: input, shape index: {}]
  %s2 = inlined_call_operand.vmem [shape: f32[1,128], index: 2, kind: input, shape index: {}]
  %s3 = inlined_call_operand.vmem [shape: bf16[32,128], index: 3, kind: output, shape index: {}]
  %s4 = sld [smem:[#allocation0]]
  $region22: #{rec_resnet_backbone_forward.11} parent=0
    _
  %s6 = ssub.s32 1, %s4
  %s7 = scalar_select 0, %s6, %s4
  // Predicated region
  $region2: #{rec_resnet_backbone_forward.11} parent=0 // pred_check
    _
  $region3: #{rec_resnet_backbone_forward.11} parent=0 // pred_check_branch
    %9 = sbr.rel (0) target = $region5
  $region4: #{rec_resnet_backbone_forward.11} parent=0 // pred_region
    _
  $region5: #{rec_resnet_backbone_forward.11} parent=0 // pred_fallthru
    _
  // Predicated region
  $region6: #{rec_resnet_backbone_forward.11} parent=0 // pred_check
    _
  $region7: #{rec_resnet_backbone_forward.11} parent=0 // pred_check_branch
    %11 = sbr.rel (0) target = $region9
  $region8: #{rec_resnet_backbone_forward.11} parent=0 // pred_region
    _
  $region9: #{rec_resnet_backbone_forward.11} parent=0 // pred_fallthru
    _
  // Predicated region
  $region10: #{rec_resnet_backbone_forward.11} parent=0 // pred_check
    _
  $region11: #{rec_resnet_backbone_forward.11} parent=0 // pred_check_branch
    %13 = sbr.rel (0) target = $region13
  $region12: #{rec_resnet_backbone_forward.11} parent=0 // pred_region
    _
  $region13: #{rec_resnet_backbone_forward.11} parent=0 // pred_fallthru
    _
  %v15 = vld [vmem:[%s0] sm:$0xf]
  %v16 = vld [vmem:[%s0 + $0x4] sm:$0xf]
  %v17 = vld [vmem:[%s0 + $0x8] sm:$0xf]
  %v18 = vld [vmem:[%s0 + $0xc] sm:$0xf]
  %v19 = vld [vmem:[%s1] sm:$0xf]
  %v20 = vld [vmem:[%s1 + $0x4] sm:$0xf]
  %v21 = vld [vmem:[%s1 + $0x8] sm:$0xf]
  %v22 = vld [vmem:[%s1 + $0xc] sm:$0xf]
  %v23 = vld [vmem:[%s1 + $0x10] sm:$0xf]
  %v24 = vld [vmem:[%s1 + $0x14] sm:$0xf]
  %v25 = vld [vmem:[%s1 + $0x18] sm:$0xf]
  %v26 = vld [vmem:[%s1 + $0x1c] sm:$0xf]
  %v27 = vld [vmem:[%s1 + $0x20] sm:$0xf]
  %v28 = vld [vmem:[%s2] sm:$0x1]
  %v30 = vperm.slane %v28, 0
  %v36 = vunpack.c.l.b16 %v15
  %v37 = vunpack.c.l.b16 %v16
  %v38 = vunpack.c.l.b16 %v17
  %v39 = vunpack.c.l.b16 %v18
  %v40 = vpack.c.b16 %v37, %v36
  %v41 = vpack.c.b16 %v39, %v38
  %v51 = vunpack.c.l.b16 %v19
  %v52 = vunpack.c.l.b16 %v20
  %v53 = vunpack.c.l.b16 %v21
  %v54 = vunpack.c.l.b16 %v22
  %v55 = vunpack.c.l.b16 %v23
  %v56 = vunpack.c.l.b16 %v24
  %v57 = vunpack.c.l.b16 %v25
  %v58 = vunpack.c.l.b16 %v26
  %v59 = vunpack.c.l.b16 %v27
  %v60 = vpack.c.b16 %v52, %v51
  %v61 = vpack.c.b16 %v54, %v53
  %v62 = vpack.c.b16 %v56, %v55
  %v63 = vpack.c.b16 %v58, %v57
  %v64 = vpack.c.b16 %v59, %v59
  %vm69 = vcmask 588800
  %v71 = vsel %vm69, %v40, 0
  %v74 = vsel %vm69, %v41, 0
  %vm76 = vcmask 1043456
  %v78 = vsel %vm76, %v64, 0
  %80 = vmatpush.bf16.msra.mxu0 0
  %81 = vmatpush.bf16.msra.mxu0 0
  %82 = vmatpush.bf16.msra.mxu0 0
  %83 = vmatpush.bf16.msra.mxu0 %v78
  %84 = vmatpush.bf16.msra.mxu0 %v63
  %85 = vmatpush.bf16.msra.mxu0 %v62
  %86 = vmatpush.bf16.msra.mxu0 %v61
  %87 = vmatpush.bf16.msra.mxu0 %v60
  %88 = vmatmul.bf16.gmra.mxu0 %v71
  %v89 = vpop.f32.mrf.mxu0
  %v90 = vadd.f32 %v30, %v89
  %v91 = vpop.f32.mrf.mxu0
  %v92 = vadd.f32 %v30, %v91
  %93 = vmatmul.bf16.gmra.mxu0 %v74
  %v94 = vpop.f32.mrf.mxu0
  %v95 = vadd.f32 %v30, %v94
  %v96 = vpop.f32.mrf.mxu0
  %v97 = vadd.f32 %v30, %v96
  %98 = vdwg.mxu0
  %v99 = vmax.f32 %v90, 0.0
  %v100 = vmax.f32 %v92, 0.0
  %v101 = vmax.f32 %v95, 0.0
  %v102 = vmax.f32 %v97, 0.0
  %v103 = vpack.c.bf16 %v99, %v99
  %v104 = vpack.c.bf16 %v100, %v100
  %v105 = vpack.c.bf16 %v101, %v101
  %v106 = vpack.c.bf16 %v102, %v102
  %107 = vst [vmem:[%s3] sm:$0xf] %v103
  %108 = vst [vmem:[%s3 + $0x4] sm:$0xf] %v104
  %109 = vst [vmem:[%s3 + $0x8] sm:$0xf] %v105
  %110 = vst [vmem:[%s3 + $0xc] sm:$0xf] %v106
  // Predicated region
  $region14: #{rec_resnet_backbone_forward.11} parent=0 // pred_check
    _
  $region15: #{rec_resnet_backbone_forward.11} parent=0 // pred_check_branch
    %112 = sbr.rel (0) target = $region17
  $region16: #{rec_resnet_backbone_forward.11} parent=0 // pred_region
    _
  $region17: #{rec_resnet_backbone_forward.11} parent=0 // pred_fallthru
    _
  // Predicated region
  $region18: #{rec_resnet_backbone_forward.11} parent=0 // pred_check
    _
  $region19: #{rec_resnet_backbone_forward.11} parent=0 // pred_check_branch
    %114 = sbr.rel (0) target = $region21
  $region20: #{rec_resnet_backbone_forward.11} parent=0 // pred_region
    _
  $region21: #{rec_resnet_backbone_forward.11} parent=0 // pred_fallthru
    _

// kernel: rec_resnet_backbone_forward.12
$region0: #{rec_resnet_backbone_forward.12}
  #allocation0 [shape = 'u32[]', space=smem, size = 0x4, offset = 0x4, fixed_abs, tag = 'smem constant byte address 0x4 - core index']
  #allocation1 [shape = 'u32[72,128]{1,0:T(1,128)}', space=vmem, size = 0x9000, scoped, tag = 'internal scratch']
  %s0 = inlined_call_operand.vmem [shape: bf16[16,144], index: 0, kind: input, shape index: {}]
  %s1 = inlined_call_operand.vmem [shape: bf16[144,128], index: 1, kind: input, shape index: {}]
  %s2 = inlined_call_operand.vmem [shape: f32[1,128], index: 2, kind: input, shape index: {}]
  %s3 = inlined_call_operand.vmem [shape: bf16[16,128], index: 3, kind: output, shape index: {}]
  %s4 = sld [smem:[#allocation0]]
  $region22: #{rec_resnet_backbone_forward.12} parent=0
    _
  %s6 = ssub.s32 1, %s4
  %s7 = scalar_select 0, %s6, %s4
  // Predicated region
  $region2: #{rec_resnet_backbone_forward.12} parent=0 // pred_check
    _
  $region3: #{rec_resnet_backbone_forward.12} parent=0 // pred_check_branch
    %9 = sbr.rel (0) target = $region5
  $region4: #{rec_resnet_backbone_forward.12} parent=0 // pred_region
    _
  $region5: #{rec_resnet_backbone_forward.12} parent=0 // pred_fallthru
    _
  // Predicated region
  $region6: #{rec_resnet_backbone_forward.12} parent=0 // pred_check
    _
  $region7: #{rec_resnet_backbone_forward.12} parent=0 // pred_check_branch
    %11 = sbr.rel (0) target = $region9
  $region8: #{rec_resnet_backbone_forward.12} parent=0 // pred_region
    _
  $region9: #{rec_resnet_backbone_forward.12} parent=0 // pred_fallthru
    _
  // Predicated region
  $region10: #{rec_resnet_backbone_forward.12} parent=0 // pred_check
    _
  $region11: #{rec_resnet_backbone_forward.12} parent=0 // pred_check_branch
    %13 = sbr.rel (0) target = $region13
  $region12: #{rec_resnet_backbone_forward.12} parent=0 // pred_region
    _
  $region13: #{rec_resnet_backbone_forward.12} parent=0 // pred_fallthru
    _
  %v15 = vld [vmem:[%s0] sm:$0xff]
  %v16 = vld [vmem:[%s0 + $0x8] sm:$0xff]
  %v17 = vld [vmem:[%s1] sm:$0xf]
  %v18 = vld [vmem:[%s1 + $0x4] sm:$0xf]
  %v19 = vld [vmem:[%s1 + $0x8] sm:$0xf]
  %v20 = vld [vmem:[%s1 + $0xc] sm:$0xf]
  %v21 = vld [vmem:[%s1 + $0x10] sm:$0xf]
  %v22 = vld [vmem:[%s1 + $0x14] sm:$0xf]
  %v23 = vld [vmem:[%s1 + $0x18] sm:$0xf]
  %v24 = vld [vmem:[%s1 + $0x1c] sm:$0xf]
  %v25 = vld [vmem:[%s1 + $0x20] sm:$0xf]
  %v26 = vld [vmem:[%s1 + $0x24] sm:$0xf]
  %v27 = vld [vmem:[%s1 + $0x28] sm:$0xf]
  %v28 = vld [vmem:[%s1 + $0x2c] sm:$0xf]
  %v29 = vld [vmem:[%s1 + $0x30] sm:$0xf]
  %v30 = vld [vmem:[%s1 + $0x34] sm:$0xf]
  %v31 = vld [vmem:[%s1 + $0x38] sm:$0xf]
  %v32 = vld [vmem:[%s1 + $0x3c] sm:$0xf]
  %v33 = vld [vmem:[%s1 + $0x40] sm:$0xf]
  %v34 = vld [vmem:[%s1 + $0x44] sm:$0xf]
  %v35 = vld [vmem:[%s2] sm:$0x1]
  %v37 = vperm.slane %v35, 0
  %v41 = vunpack.c.l.b16 %v15
  %v42 = vunpack.c.h.b16 %v15
  %v43 = vunpack.c.l.b16 %v16
  %v44 = vunpack.c.h.b16 %v16
  %v45 = vpack.c.b16 %v43, %v41
  %v46 = vpack.c.b16 %v44, %v42
  %v66 = vunpack.c.l.b16 %v17
  %v67 = vunpack.c.l.b16 %v18
  %v68 = vunpack.c.l.b16 %v19
  %v69 = vunpack.c.l.b16 %v20
  %v70 = vunpack.c.l.b16 %v21
  %v71 = vunpack.c.l.b16 %v22
  %v72 = vunpack.c.l.b16 %v23
  %v73 = vunpack.c.l.b16 %v24
  %v74 = vunpack.c.l.b16 %v25
  %v75 = vunpack.c.l.b16 %v26
  %v76 = vunpack.c.l.b16 %v27
  %v77 = vunpack.c.l.b16 %v28
  %v78 = vunpack.c.l.b16 %v29
  %v79 = vunpack.c.l.b16 %v30
  %v80 = vunpack.c.l.b16 %v31
  %v81 = vunpack.c.l.b16 %v32
  %v82 = vunpack.c.l.b16 %v33
  %v83 = vunpack.c.l.b16 %v34
  %v84 = vpack.c.b16 %v67, %v66
  %v85 = vpack.c.b16 %v69, %v68
  %v86 = vpack.c.b16 %v71, %v70
  %v87 = vpack.c.b16 %v73, %v72
  %v88 = vpack.c.b16 %v75, %v74
  %v89 = vpack.c.b16 %v77, %v76
  %v90 = vpack.c.b16 %v79, %v78
  %v91 = vpack.c.b16 %v81, %v80
  %v92 = vpack.c.b16 %v83, %v82
  %vm102 = vcmask 130048
  %v104 = vsel %vm102, %v46, 0
  %106 = vmatpush.bf16.msra.mxu0 %v91
  %107 = vmatpush.bf16.msra.mxu0 %v90
  %108 = vmatpush.bf16.msra.mxu0 %v89
  %109 = vmatpush.bf16.msra.mxu0 %v88
  %110 = vmatpush.bf16.msra.mxu0 %v87
  %111 = vmatpush.bf16.msra.mxu0 %v86
  %112 = vmatpush.bf16.msra.mxu0 %v85
  %113 = vmatpush.bf16.msra.mxu0 %v84
  %114 = vmatmul.bf16.gmra.mxu0 %v45
  %v115 = vpop.f32.mrf.mxu0
  %v116 = vadd.f32 %v37, %v115
  %v117 = vpop.f32.mrf.mxu0
  %v118 = vadd.f32 %v37, %v117
  %119 = vdwg.mxu0
  %120 = vmatpush.bf16.msra.mxu0 0
  %121 = vmatpush.bf16.msra.mxu0 0
  %122 = vmatpush.bf16.msra.mxu0 0
  %123 = vmatpush.bf16.msra.mxu0 0
  %124 = vmatpush.bf16.msra.mxu0 0
  %125 = vmatpush.bf16.msra.mxu0 0
  %126 = vmatpush.bf16.msra.mxu0 0
  %127 = vmatpush.bf16.msra.mxu0 %v92
  %128 = vmatmul.bf16.gmra.mxu0 %v104
  %v129 = vpop.f32.mrf.mxu0
  %v130 = vadd.f32 %v116, %v129
  %v131 = vpop.f32.mrf.mxu0
  %v132 = vadd.f32 %v118, %v131
  %133 = vdwg.mxu0
  %v134 = vmax.f32 %v130, 0.0
  %v135 = vmax.f32 %v132, 0.0
  %v136 = vpack.c.bf16 %v134, %v134
  %v137 = vpack.c.bf16 %v135, %v135
  %138 = vst [vmem:[%s3] sm:$0xf] %v136
  %139 = vst [vmem:[%s3 + $0x4] sm:$0xf] %v137
  // Predicated region
  $region14: #{rec_resnet_backbone_forward.12} parent=0 // pred_check
    _
  $region15: #{rec_resnet_backbone_forward.12} parent=0 // pred_check_branch
    %141 = sbr.rel (0) target = $region17
  $region16: #{rec_resnet_backbone_forward.12} parent=0 // pred_region
    _
  $region17: #{rec_resnet_backbone_forward.12} parent=0 // pred_fallthru
    _
  // Predicated region
  $region18: #{rec_resnet_backbone_forward.12} parent=0 // pred_check
    _
  $region19: #{rec_resnet_backbone_forward.12} parent=0 // pred_check_branch
    %143 = sbr.rel (0) target = $region21
  $region20: #{rec_resnet_backbone_forward.12} parent=0 // pred_region
    _
  $region21: #{rec_resnet_backbone_forward.12} parent=0 // pred_fallthru
    _

// kernel: rec_resnet_backbone_forward.13
$region0: #{rec_resnet_backbone_forward.13}
  #allocation0 [shape = 'u32[]', space=smem, size = 0x4, offset = 0x4, fixed_abs, tag = 'smem constant byte address 0x4 - core index']
  #allocation1 [shape = 'u32[72,128]{1,0:T(1,128)}', space=vmem, size = 0x9000, scoped, tag = 'internal scratch']
  %s0 = inlined_call_operand.vmem [shape: bf16[16,288], index: 0, kind: input, shape index: {}]
  %s1 = inlined_call_operand.vmem [shape: bf16[288,128], index: 1, kind: input, shape index: {}]
  %s2 = inlined_call_operand.vmem [shape: f32[1,128], index: 2, kind: input, shape index: {}]
  %s3 = inlined_call_operand.vmem [shape: bf16[16,128], index: 3, kind: output, shape index: {}]
  %s4 = sld [smem:[#allocation0]]
  $region22: #{rec_resnet_backbone_forward.13} parent=0
    _
  %s6 = ssub.s32 1, %s4
  %s7 = scalar_select 0, %s6, %s4
  // Predicated region
  $region2: #{rec_resnet_backbone_forward.13} parent=0 // pred_check
    _
  $region3: #{rec_resnet_backbone_forward.13} parent=0 // pred_check_branch
    %9 = sbr.rel (0) target = $region5
  $region4: #{rec_resnet_backbone_forward.13} parent=0 // pred_region
    _
  $region5: #{rec_resnet_backbone_forward.13} parent=0 // pred_fallthru
    _
  // Predicated region
  $region6: #{rec_resnet_backbone_forward.13} parent=0 // pred_check
    _
  $region7: #{rec_resnet_backbone_forward.13} parent=0 // pred_check_branch
    %11 = sbr.rel (0) target = $region9
  $region8: #{rec_resnet_backbone_forward.13} parent=0 // pred_region
    _
  $region9: #{rec_resnet_backbone_forward.13} parent=0 // pred_fallthru
    _
  // Predicated region
  $region10: #{rec_resnet_backbone_forward.13} parent=0 // pred_check
    _
  $region11: #{rec_resnet_backbone_forward.13} parent=0 // pred_check_branch
    %13 = sbr.rel (0) target = $region13
  $region12: #{rec_resnet_backbone_forward.13} parent=0 // pred_region
    _
  $region13: #{rec_resnet_backbone_forward.13} parent=0 // pred_fallthru
    _
  %v15 = vld [vmem:[%s0] sm:$0xff]
  %v16 = vld [vmem:[%s0 + $0x8] sm:$0xf]
  %v17 = vld [vmem:[%s0 + $0xc] sm:$0xff]
  %v18 = vld [vmem:[%s0 + $0x14] sm:$0xf]
  %v19 = vld [vmem:[%s1] sm:$0xf]
  %v20 = vld [vmem:[%s1 + $0x4] sm:$0xf]
  %v21 = vld [vmem:[%s1 + $0x8] sm:$0xf]
  %v22 = vld [vmem:[%s1 + $0xc] sm:$0xf]
  %v23 = vld [vmem:[%s1 + $0x10] sm:$0xf]
  %v24 = vld [vmem:[%s1 + $0x14] sm:$0xf]
  %v25 = vld [vmem:[%s1 + $0x18] sm:$0xf]
  %v26 = vld [vmem:[%s1 + $0x1c] sm:$0xf]
  %v27 = vld [vmem:[%s1 + $0x20] sm:$0xf]
  %v28 = vld [vmem:[%s1 + $0x24] sm:$0xf]
  %v29 = vld [vmem:[%s1 + $0x28] sm:$0xf]
  %v30 = vld [vmem:[%s1 + $0x2c] sm:$0xf]
  %v31 = vld [vmem:[%s1 + $0x30] sm:$0xf]
  %v32 = vld [vmem:[%s1 + $0x34] sm:$0xf]
  %v33 = vld [vmem:[%s1 + $0x38] sm:$0xf]
  %v34 = vld [vmem:[%s1 + $0x3c] sm:$0xf]
  %v35 = vld [vmem:[%s1 + $0x40] sm:$0xf]
  %v36 = vld [vmem:[%s1 + $0x44] sm:$0xf]
  %v37 = vld [vmem:[%s1 + $0x48] sm:$0xf]
  %v38 = vld [vmem:[%s1 + $0x4c] sm:$0xf]
  %v39 = vld [vmem:[%s1 + $0x50] sm:$0xf]
  %v40 = vld [vmem:[%s1 + $0x54] sm:$0xf]
  %v41 = vld [vmem:[%s1 + $0x58] sm:$0xf]
  %v42 = vld [vmem:[%s1 + $0x5c] sm:$0xf]
  %v43 = vld [vmem:[%s1 + $0x60] sm:$0xf]
  %v44 = vld [vmem:[%s1 + $0x64] sm:$0xf]
  %v45 = vld [vmem:[%s1 + $0x68] sm:$0xf]
  %v46 = vld [vmem:[%s1 + $0x6c] sm:$0xf]
  %v47 = vld [vmem:[%s1 + $0x70] sm:$0xf]
  %v48 = vld [vmem:[%s1 + $0x74] sm:$0xf]
  %v49 = vld [vmem:[%s1 + $0x78] sm:$0xf]
  %v50 = vld [vmem:[%s1 + $0x7c] sm:$0xf]
  %v51 = vld [vmem:[%s1 + $0x80] sm:$0xf]
  %v52 = vld [vmem:[%s1 + $0x84] sm:$0xf]
  %v53 = vld [vmem:[%s1 + $0x88] sm:$0xf]
  %v54 = vld [vmem:[%s1 + $0x8c] sm:$0xf]
  %v55 = vld [vmem:[%s2] sm:$0x1]
  %v57 = vperm.slane %v55, 0
  %v63 = vunpack.c.l.b16 %v15
  %v64 = vunpack.c.h.b16 %v15
  %v65 = vunpack.c.l.b16 %v16
  %v66 = vunpack.c.l.b16 %v17
  %v67 = vunpack.c.h.b16 %v17
  %v68 = vunpack.c.l.b16 %v18
  %v69 = vpack.c.b16 %v66, %v63
  %v70 = vpack.c.b16 %v67, %v64
  %v71 = vpack.c.b16 %v68, %v65
  %v110 = vunpack.c.l.b16 %v19
  %v111 = vunpack.c.l.b16 %v20
  %v112 = vunpack.c.l.b16 %v21
  %v113 = vunpack.c.l.b16 %v22
  %v114 = vunpack.c.l.b16 %v23
  %v115 = vunpack.c.l.b16 %v24
  %v116 = vunpack.c.l.b16 %v25
  %v117 = vunpack.c.l.b16 %v26
  %v118 = vunpack.c.l.b16 %v27
  %v119 = vunpack.c.l.b16 %v28
  %v120 = vunpack.c.l.b16 %v29
  %v121 = vunpack.c.l.b16 %v30
  %v122 = vunpack.c.l.b16 %v31
  %v123 = vunpack.c.l.b16 %v32
  %v124 = vunpack.c.l.b16 %v33
  %v125 = vunpack.c.l.b16 %v34
  %v126 = vunpack.c.l.b16 %v35
  %v127 = vunpack.c.l.b16 %v36
  %v128 = vunpack.c.l.b16 %v37
  %v129 = vunpack.c.l.b16 %v38
  %v130 = vunpack.c.l.b16 %v39
  %v131 = vunpack.c.l.b16 %v40
  %v132 = vunpack.c.l.b16 %v41
  %v133 = vunpack.c.l.b16 %v42
  %v134 = vunpack.c.l.b16 %v43
  %v135 = vunpack.c.l.b16 %v44
  %v136 = vunpack.c.l.b16 %v45
  %v137 = vunpack.c.l.b16 %v46
  %v138 = vunpack.c.l.b16 %v47
  %v139 = vunpack.c.l.b16 %v48
  %v140 = vunpack.c.l.b16 %v49
  %v141 = vunpack.c.l.b16 %v50
  %v142 = vunpack.c.l.b16 %v51
  %v143 = vunpack.c.l.b16 %v52
  %v144 = vunpack.c.l.b16 %v53
  %v145 = vunpack.c.l.b16 %v54
  %v146 = vpack.c.b16 %v111, %v110
  %v147 = vpack.c.b16 %v113, %v112
  %v148 = vpack.c.b16 %v115, %v114
  %v149 = vpack.c.b16 %v117, %v116
  %v150 = vpack.c.b16 %v119, %v118
  %v151 = vpack.c.b16 %v121, %v120
  %v152 = vpack.c.b16 %v123, %v122
  %v153 = vpack.c.b16 %v125, %v124
  %v154 = vpack.c.b16 %v127, %v126
  %v155 = vpack.c.b16 %v129, %v128
  %v156 = vpack.c.b16 %v131, %v130
  %v157 = vpack.c.b16 %v133, %v132
  %v158 = vpack.c.b16 %v135, %v134
  %v159 = vpack.c.b16 %v137, %v136
  %v160 = vpack.c.b16 %v139, %v138
  %v161 = vpack.c.b16 %v141, %v140
  %v162 = vpack.c.b16 %v143, %v142
  %v163 = vpack.c.b16 %v145, %v144
  %vm182 = vcmask 261120
  %v184 = vsel %vm182, %v71, 0
  %186 = vmatpush.bf16.msra.mxu0 %v153
  %187 = vmatpush.bf16.msra.mxu0 %v152
  %188 = vmatpush.bf16.msra.mxu0 %v151
  %189 = vmatpush.bf16.msra.mxu0 %v150
  %190 = vmatpush.bf16.msra.mxu0 %v149
  %191 = vmatpush.bf16.msra.mxu0 %v148
  %192 = vmatpush.bf16.msra.mxu0 %v147
  %193 = vmatpush.bf16.msra.mxu0 %v146
  %194 = vmatmul.bf16.gmra.mxu0 %v69
  %v195 = vpop.f32.mrf.mxu0
  %v196 = vadd.f32 %v57, %v195
  %v197 = vpop.f32.mrf.mxu0
  %v198 = vadd.f32 %v57, %v197
  %199 = vdwg.mxu0
  %200 = vmatpush.bf16.msra.mxu0 %v161
  %201 = vmatpush.bf16.msra.mxu0 %v160
  %202 = vmatpush.bf16.msra.mxu0 %v159
  %203 = vmatpush.bf16.msra.mxu0 %v158
  %204 = vmatpush.bf16.msra.mxu0 %v157
  %205 = vmatpush.bf16.msra.mxu0 %v156
  %206 = vmatpush.bf16.msra.mxu0 %v155
  %207 = vmatpush.bf16.msra.mxu0 %v154
  %208 = vmatmul.bf16.gmra.mxu0 %v70
  %v209 = vpop.f32.mrf.mxu0
  %v210 = vadd.f32 %v196, %v209
  %v211 = vpop.f32.mrf.mxu0
  %v212 = vadd.f32 %v198, %v211
  %213 = vdwg.mxu0
  %214 = vmatpush.bf16.msra.mxu0 0
  %215 = vmatpush.bf16.msra.mxu0 0
  %216 = vmatpush.bf16.msra.mxu0 0
  %217 = vmatpush.bf16.msra.mxu0 0
  %218 = vmatpush.bf16.msra.mxu0 0
  %219 = vmatpush.bf16.msra.mxu0 0
  %220 = vmatpush.bf16.msra.mxu0 %v163
  %221 = vmatpush.bf16.msra.mxu0 %v162
  %222 = vmatmul.bf16.gmra.mxu0 %v184
  %v223 = vpop.f32.mrf.mxu0
  %v224 = vadd.f32 %v210, %v223
  %v225 = vpop.f32.mrf.mxu0
  %v226 = vadd.f32 %v212, %v225
  %227 = vdwg.mxu0
  %v228 = vmax.f32 %v224, 0.0
  %v229 = vmax.f32 %v226, 0.0
  %v230 = vpack.c.bf16 %v228, %v228
  %v231 = vpack.c.bf16 %v229, %v229
  %232 = vst [vmem:[%s3] sm:$0xf] %v230
  %233 = vst [vmem:[%s3 + $0x4] sm:$0xf] %v231
  // Predicated region
  $region14: #{rec_resnet_backbone_forward.13} parent=0 // pred_check
    _
  $region15: #{rec_resnet_backbone_forward.13} parent=0 // pred_check_branch
    %235 = sbr.rel (0) target = $region17
  $region16: #{rec_resnet_backbone_forward.13} parent=0 // pred_region
    _
  $region17: #{rec_resnet_backbone_forward.13} parent=0 // pred_fallthru
    _
  // Predicated region
  $region18: #{rec_resnet_backbone_forward.13} parent=0 // pred_check
    _
  $region19: #{rec_resnet_backbone_forward.13} parent=0 // pred_check_branch
    %237 = sbr.rel (0) target = $region21
  $region20: #{rec_resnet_backbone_forward.13} parent=0 // pred_region
    _
  $region21: #{rec_resnet_backbone_forward.13} parent=0 // pred_fallthru
    _

// kernel: rec_resnet_backbone_forward.17
$region0: #{rec_resnet_backbone_forward.17}
  #allocation0 [shape = 'u32[]', space=smem, size = 0x4, offset = 0x4, fixed_abs, tag = 'smem constant byte address 0x4 - core index']
  #allocation1 [shape = 'u32[72,128]{1,0:T(1,128)}', space=vmem, size = 0x9000, scoped, tag = 'internal scratch']
  %s0 = inlined_call_operand.vmem [shape: bf16[16,576], index: 0, kind: input, shape index: {}]
  %s1 = inlined_call_operand.vmem [shape: bf16[576,128], index: 1, kind: input, shape index: {}]
  %s2 = inlined_call_operand.vmem [shape: f32[1,128], index: 2, kind: input, shape index: {}]
  %s3 = inlined_call_operand.vmem [shape: f32[16,128], index: 3, kind: output, shape index: {}]
  %s4 = sld [smem:[#allocation0]]
  $region22: #{rec_resnet_backbone_forward.17} parent=0
    _
  %s6 = ssub.s32 1, %s4
  %s7 = scalar_select 0, %s6, %s4
  // Predicated region
  $region2: #{rec_resnet_backbone_forward.17} parent=0 // pred_check
    _
  $region3: #{rec_resnet_backbone_forward.17} parent=0 // pred_check_branch
    %9 = sbr.rel (0) target = $region5
  $region4: #{rec_resnet_backbone_forward.17} parent=0 // pred_region
    _
  $region5: #{rec_resnet_backbone_forward.17} parent=0 // pred_fallthru
    _
  // Predicated region
  $region6: #{rec_resnet_backbone_forward.17} parent=0 // pred_check
    _
  $region7: #{rec_resnet_backbone_forward.17} parent=0 // pred_check_branch
    %11 = sbr.rel (0) target = $region9
  $region8: #{rec_resnet_backbone_forward.17} parent=0 // pred_region
    _
  $region9: #{rec_resnet_backbone_forward.17} parent=0 // pred_fallthru
    _
  // Predicated region
  $region10: #{rec_resnet_backbone_forward.17} parent=0 // pred_check
    _
  $region11: #{rec_resnet_backbone_forward.17} parent=0 // pred_check_branch
    %13 = sbr.rel (0) target = $region13
  $region12: #{rec_resnet_backbone_forward.17} parent=0 // pred_region
    _
  $region13: #{rec_resnet_backbone_forward.17} parent=0 // pred_fallthru
    _
  %v15 = vld [vmem:[%s0] sm:$0xff]
  %v16 = vld [vmem:[%s0 + $0x8] sm:$0xff]
  %v17 = vld [vmem:[%s0 + $0x10] sm:$0xf]
  %v18 = vld [vmem:[%s0 + $0x14] sm:$0xff]
  %v19 = vld [vmem:[%s0 + $0x1c] sm:$0xff]
  %v20 = vld [vmem:[%s0 + $0x24] sm:$0xf]
  %v21 = vld [vmem:[%s1] sm:$0xf]
  %v22 = vld [vmem:[%s1 + $0x4] sm:$0xf]
  %v23 = vld [vmem:[%s1 + $0x8] sm:$0xf]
  %v24 = vld [vmem:[%s1 + $0xc] sm:$0xf]
  %v25 = vld [vmem:[%s1 + $0x10] sm:$0xf]
  %v26 = vld [vmem:[%s1 + $0x14] sm:$0xf]
  %v27 = vld [vmem:[%s1 + $0x18] sm:$0xf]
  %v28 = vld [vmem:[%s1 + $0x1c] sm:$0xf]
  %v29 = vld [vmem:[%s1 + $0x20] sm:$0xf]
  %v30 = vld [vmem:[%s1 + $0x24] sm:$0xf]
  %v31 = vld [vmem:[%s1 + $0x28] sm:$0xf]
  %v32 = vld [vmem:[%s1 + $0x2c] sm:$0xf]
  %v33 = vld [vmem:[%s1 + $0x30] sm:$0xf]
  %v34 = vld [vmem:[%s1 + $0x34] sm:$0xf]
  %v35 = vld [vmem:[%s1 + $0x38] sm:$0xf]
  %v36 = vld [vmem:[%s1 + $0x3c] sm:$0xf]
  %v37 = vld [vmem:[%s1 + $0x40] sm:$0xf]
  %v38 = vld [vmem:[%s1 + $0x44] sm:$0xf]
  %v39 = vld [vmem:[%s1 + $0x48] sm:$0xf]
  %v40 = vld [vmem:[%s1 + $0x4c] sm:$0xf]
  %v41 = vld [vmem:[%s1 + $0x50] sm:$0xf]
  %v42 = vld [vmem:[%s1 + $0x54] sm:$0xf]
  %v43 = vld [vmem:[%s1 + $0x58] sm:$0xf]
  %v44 = vld [vmem:[%s1 + $0x5c] sm:$0xf]
  %v45 = vld [vmem:[%s1 + $0x60] sm:$0xf]
  %v46 = vld [vmem:[%s1 + $0x64] sm:$0xf]
  %v47 = vld [vmem:[%s1 + $0x68] sm:$0xf]
  %v48 = vld [vmem:[%s1 + $0x6c] sm:$0xf]
  %v49 = vld [vmem:[%s1 + $0x70] sm:$0xf]
  %v50 = vld [vmem:[%s1 + $0x74] sm:$0xf]
  %v51 = vld [vmem:[%s1 + $0x78] sm:$0xf]
  %v52 = vld [vmem:[%s1 + $0x7c] sm:$0xf]
  %v53 = vld [vmem:[%s1 + $0x80] sm:$0xf]
  %v54 = vld [vmem:[%s1 + $0x84] sm:$0xf]
  %v55 = vld [vmem:[%s1 + $0x88] sm:$0xf]
  %v56 = vld [vmem:[%s1 + $0x8c] sm:$0xf]
  %v57 = vld [vmem:[%s1 + $0x90] sm:$0xf]
  %v58 = vld [vmem:[%s1 + $0x94] sm:$0xf]
  %v59 = vld [vmem:[%s1 + $0x98] sm:$0xf]
  %v60 = vld [vmem:[%s1 + $0x9c] sm:$0xf]
  %v61 = vld [vmem:[%s1 + $0xa0] sm:$0xf]
  %v62 = vld [vmem:[%s1 + $0xa4] sm:$0xf]
  %v63 = vld [vmem:[%s1 + $0xa8] sm:$0xf]
  %v64 = vld [vmem:[%s1 + $0xac] sm:$0xf]
  %v65 = vld [vmem:[%s1 + $0xb0] sm:$0xf]
  %v66 = vld [vmem:[%s1 + $0xb4] sm:$0xf]
  %v67 = vld [vmem:[%s1 + $0xb8] sm:$0xf]
  %v68 = vld [vmem:[%s1 + $0xbc] sm:$0xf]
  %v69 = vld [vmem:[%s1 + $0xc0] sm:$0xf]
  %v70 = vld [vmem:[%s1 + $0xc4] sm:$0xf]
  %v71 = vld [vmem:[%s1 + $0xc8] sm:$0xf]
  %v72 = vld [vmem:[%s1 + $0xcc] sm:$0xf]
  %v73 = vld [vmem:[%s1 + $0xd0] sm:$0xf]
  %v74 = vld [vmem:[%s1 + $0xd4] sm:$0xf]
  %v75 = vld [vmem:[%s1 + $0xd8] sm:$0xf]
  %v76 = vld [vmem:[%s1 + $0xdc] sm:$0xf]
  %v77 = vld [vmem:[%s1 + $0xe0] sm:$0xf]
  %v78 = vld [vmem:[%s1 + $0xe4] sm:$0xf]
  %v79 = vld [vmem:[%s1 + $0xe8] sm:$0xf]
  %v80 = vld [vmem:[%s1 + $0xec] sm:$0xf]
  %v81 = vld [vmem:[%s1 + $0xf0] sm:$0xf]
  %v82 = vld [vmem:[%s1 + $0xf4] sm:$0xf]
  %v83 = vld [vmem:[%s1 + $0xf8] sm:$0xf]
  %v84 = vld [vmem:[%s1 + $0xfc] sm:$0xf]
  %v85 = vld [vmem:[%s1 + $0x100] sm:$0xf]
  %v86 = vld [vmem:[%s1 + $0x104] sm:$0xf]
  %v87 = vld [vmem:[%s1 + $0x108] sm:$0xf]
  %v88 = vld [vmem:[%s1 + $0x10c] sm:$0xf]
  %v89 = vld [vmem:[%s1 + $0x110] sm:$0xf]
  %v90 = vld [vmem:[%s1 + $0x114] sm:$0xf]
  %v91 = vld [vmem:[%s1 + $0x118] sm:$0xf]
  %v92 = vld [vmem:[%s1 + $0x11c] sm:$0xf]
  %v93 = vld [vmem:[%s2] sm:$0x1]
  %v95 = vperm.slane %v93, 0
  %v103 = vunpack.c.l.b16 %v15
  %v104 = vunpack.c.h.b16 %v15
  %v105 = vunpack.c.l.b16 %v16
  %v106 = vunpack.c.h.b16 %v16
  %v107 = vunpack.c.l.b16 %v17
  %v108 = vunpack.c.l.b16 %v18
  %v109 = vunpack.c.h.b16 %v18
  %v110 = vunpack.c.l.b16 %v19
  %v111 = vunpack.c.h.b16 %v19
  %v112 = vunpack.c.l.b16 %v20
  %v113 = vpack.c.b16 %v108, %v103
  %v114 = vpack.c.b16 %v109, %v104
  %v115 = vpack.c.b16 %v110, %v105
  %v116 = vpack.c.b16 %v111, %v106
  %v117 = vpack.c.b16 %v112, %v107
  %v194 = vunpack.c.l.b16 %v21
  %v195 = vunpack.c.l.b16 %v22
  %v196 = vunpack.c.l.b16 %v23
  %v197 = vunpack.c.l.b16 %v24
  %v198 = vunpack.c.l.b16 %v25
  %v199 = vunpack.c.l.b16 %v26
  %v200 = vunpack.c.l.b16 %v27
  %v201 = vunpack.c.l.b16 %v28
  %v202 = vunpack.c.l.b16 %v29
  %v203 = vunpack.c.l.b16 %v30
  %v204 = vunpack.c.l.b16 %v31
  %v205 = vunpack.c.l.b16 %v32
  %v206 = vunpack.c.l.b16 %v33
  %v207 = vunpack.c.l.b16 %v34
  %v208 = vunpack.c.l.b16 %v35
  %v209 = vunpack.c.l.b16 %v36
  %v210 = vunpack.c.l.b16 %v37
  %v211 = vunpack.c.l.b16 %v38
  %v212 = vunpack.c.l.b16 %v39
  %v213 = vunpack.c.l.b16 %v40
  %v214 = vunpack.c.l.b16 %v41
  %v215 = vunpack.c.l.b16 %v42
  %v216 = vunpack.c.l.b16 %v43
  %v217 = vunpack.c.l.b16 %v44
  %v218 = vunpack.c.l.b16 %v45
  %v219 = vunpack.c.l.b16 %v46
  %v220 = vunpack.c.l.b16 %v47
  %v221 = vunpack.c.l.b16 %v48
  %v222 = vunpack.c.l.b16 %v49
  %v223 = vunpack.c.l.b16 %v50
  %v224 = vunpack.c.l.b16 %v51
  %v225 = vunpack.c.l.b16 %v52
  %v226 = vunpack.c.l.b16 %v53
  %v227 = vunpack.c.l.b16 %v54
  %v228 = vunpack.c.l.b16 %v55
  %v229 = vunpack.c.l.b16 %v56
  %v230 = vunpack.c.l.b16 %v57
  %v231 = vunpack.c.l.b16 %v58
  %v232 = vunpack.c.l.b16 %v59
  %v233 = vunpack.c.l.b16 %v60
  %v234 = vunpack.c.l.b16 %v61
  %v235 = vunpack.c.l.b16 %v62
  %v236 = vunpack.c.l.b16 %v63
  %v237 = vunpack.c.l.b16 %v64
  %v238 = vunpack.c.l.b16 %v65
  %v239 = vunpack.c.l.b16 %v66
  %v240 = vunpack.c.l.b16 %v67
  %v241 = vunpack.c.l.b16 %v68
  %v242 = vunpack.c.l.b16 %v69
  %v243 = vunpack.c.l.b16 %v70
  %v244 = vunpack.c.l.b16 %v71
  %v245 = vunpack.c.l.b16 %v72
  %v246 = vunpack.c.l.b16 %v73
  %v247 = vunpack.c.l.b16 %v74
  %v248 = vunpack.c.l.b16 %v75
  %v249 = vunpack.c.l.b16 %v76
  %v250 = vunpack.c.l.b16 %v77
  %v251 = vunpack.c.l.b16 %v78
  %v252 = vunpack.c.l.b16 %v79
  %v253 = vunpack.c.l.b16 %v80
  %v254 = vunpack.c.l.b16 %v81
  %v255 = vunpack.c.l.b16 %v82
  %v256 = vunpack.c.l.b16 %v83
  %v257 = vunpack.c.l.b16 %v84
  %v258 = vunpack.c.l.b16 %v85
  %v259 = vunpack.c.l.b16 %v86
  %v260 = vunpack.c.l.b16 %v87
  %v261 = vunpack.c.l.b16 %v88
  %v262 = vunpack.c.l.b16 %v89
  %v263 = vunpack.c.l.b16 %v90
  %v264 = vunpack.c.l.b16 %v91
  %v265 = vunpack.c.l.b16 %v92
  %v266 = vpack.c.b16 %v195, %v194
  %v267 = vpack.c.b16 %v197, %v196
  %v268 = vpack.c.b16 %v199, %v198
  %v269 = vpack.c.b16 %v201, %v200
  %v270 = vpack.c.b16 %v203, %v202
  %v271 = vpack.c.b16 %v205, %v204
  %v272 = vpack.c.b16 %v207, %v206
  %v273 = vpack.c.b16 %v209, %v208
  %v274 = vpack.c.b16 %v211, %v210
  %v275 = vpack.c.b16 %v213, %v212
  %v276 = vpack.c.b16 %v215, %v214
  %v277 = vpack.c.b16 %v217, %v216
  %v278 = vpack.c.b16 %v219, %v218
  %v279 = vpack.c.b16 %v221, %v220
  %v280 = vpack.c.b16 %v223, %v222
  %v281 = vpack.c.b16 %v225, %v224
  %v282 = vpack.c.b16 %v227, %v226
  %v283 = vpack.c.b16 %v229, %v228
  %v284 = vpack.c.b16 %v231, %v230
  %v285 = vpack.c.b16 %v233, %v232
  %v286 = vpack.c.b16 %v235, %v234
  %v287 = vpack.c.b16 %v237, %v236
  %v288 = vpack.c.b16 %v239, %v238
  %v289 = vpack.c.b16 %v241, %v240
  %v290 = vpack.c.b16 %v243, %v242
  %v291 = vpack.c.b16 %v245, %v244
  %v292 = vpack.c.b16 %v247, %v246
  %v293 = vpack.c.b16 %v249, %v248
  %v294 = vpack.c.b16 %v251, %v250
  %v295 = vpack.c.b16 %v253, %v252
  %v296 = vpack.c.b16 %v255, %v254
  %v297 = vpack.c.b16 %v257, %v256
  %v298 = vpack.c.b16 %v259, %v258
  %v299 = vpack.c.b16 %v261, %v260
  %v300 = vpack.c.b16 %v263, %v262
  %v301 = vpack.c.b16 %v265, %v264
  %vm338 = vcmask 523264
  %v340 = vsel %vm338, %v117, 0
  %342 = vmatpush.bf16.msra.mxu0 %v273
  %343 = vmatpush.bf16.msra.mxu0 %v272
  %344 = vmatpush.bf16.msra.mxu0 %v271
  %345 = vmatpush.bf16.msra.mxu0 %v270
  %346 = vmatpush.bf16.msra.mxu0 %v269
  %347 = vmatpush.bf16.msra.mxu0 %v268
  %348 = vmatpush.bf16.msra.mxu0 %v267
  %349 = vmatpush.bf16.msra.mxu0 %v266
  %350 = vmatmul.bf16.gmra.mxu0 %v113
  %v351 = vpop.f32.mrf.mxu0
  %v352 = vadd.f32 %v95, %v351
  %v353 = vpop.f32.mrf.mxu0
  %v354 = vadd.f32 %v95, %v353
  %355 = vdwg.mxu0
  %356 = vmatpush.bf16.msra.mxu0 %v281
  %357 = vmatpush.bf16.msra.mxu0 %v280
  %358 = vmatpush.bf16.msra.mxu0 %v279
  %359 = vmatpush.bf16.msra.mxu0 %v278
  %360 = vmatpush.bf16.msra.mxu0 %v277
  %361 = vmatpush.bf16.msra.mxu0 %v276
  %362 = vmatpush.bf16.msra.mxu0 %v275
  %363 = vmatpush.bf16.msra.mxu0 %v274
  %364 = vmatmul.bf16.gmra.mxu0 %v114
  %v365 = vpop.f32.mrf.mxu0
  %v366 = vadd.f32 %v352, %v365
  %v367 = vpop.f32.mrf.mxu0
  %v368 = vadd.f32 %v354, %v367
  %369 = vdwg.mxu0
  %370 = vmatpush.bf16.msra.mxu0 %v289
  %371 = vmatpush.bf16.msra.mxu0 %v288
  %372 = vmatpush.bf16.msra.mxu0 %v287
  %373 = vmatpush.bf16.msra.mxu0 %v286
  %374 = vmatpush.bf16.msra.mxu0 %v285
  %375 = vmatpush.bf16.msra.mxu0 %v284
  %376 = vmatpush.bf16.msra.mxu0 %v283
  %377 = vmatpush.bf16.msra.mxu0 %v282
  %378 = vmatmul.bf16.gmra.mxu0 %v115
  %v379 = vpop.f32.mrf.mxu0
  %v380 = vadd.f32 %v366, %v379
  %v381 = vpop.f32.mrf.mxu0
  %v382 = vadd.f32 %v368, %v381
  %383 = vdwg.mxu0
  %384 = vmatpush.bf16.msra.mxu0 %v297
  %385 = vmatpush.bf16.msra.mxu0 %v296
  %386 = vmatpush.bf16.msra.mxu0 %v295
  %387 = vmatpush.bf16.msra.mxu0 %v294
  %388 = vmatpush.bf16.msra.mxu0 %v293
  %389 = vmatpush.bf16.msra.mxu0 %v292
  %390 = vmatpush.bf16.msra.mxu0 %v291
  %391 = vmatpush.bf16.msra.mxu0 %v290
  %392 = vmatmul.bf16.gmra.mxu0 %v116
  %v393 = vpop.f32.mrf.mxu0
  %v394 = vadd.f32 %v380, %v393
  %v395 = vpop.f32.mrf.mxu0
  %v396 = vadd.f32 %v382, %v395
  %397 = vdwg.mxu0
  %398 = vmatpush.bf16.msra.mxu0 0
  %399 = vmatpush.bf16.msra.mxu0 0
  %400 = vmatpush.bf16.msra.mxu0 0
  %401 = vmatpush.bf16.msra.mxu0 0
  %402 = vmatpush.bf16.msra.mxu0 %v301
  %403 = vmatpush.bf16.msra.mxu0 %v300
  %404 = vmatpush.bf16.msra.mxu0 %v299
  %405 = vmatpush.bf16.msra.mxu0 %v298
  %406 = vmatmul.bf16.gmra.mxu0 %v340
  %v407 = vpop.f32.mrf.mxu0
  %v408 = vadd.f32 %v394, %v407
  %v409 = vpop.f32.mrf.mxu0
  %v410 = vadd.f32 %v396, %v409
  %411 = vdwg.mxu0
  %412 = vst [vmem:[%s3] sm:$0xff] %v408
  %413 = vst [vmem:[%s3 + $0x8] sm:$0xff] %v410
  // Predicated region
  $region14: #{rec_resnet_backbone_forward.17} parent=0 // pred_check
    _
  $region15: #{rec_resnet_backbone_forward.17} parent=0 // pred_check_branch
    %415 = sbr.rel (0) target = $region17
  $region16: #{rec_resnet_backbone_forward.17} parent=0 // pred_region
    _
  $region17: #{rec_resnet_backbone_forward.17} parent=0 // pred_fallthru
    _
  // Predicated region
  $region18: #{rec_resnet_backbone_forward.17} parent=0 // pred_check
    _
  $region19: #{rec_resnet_backbone_forward.17} parent=0 // pred_check_branch
    %417 = sbr.rel (0) target = $region21
  $region20: #{rec_resnet_backbone_forward.17} parent=0 // pred_region
    _
  $region21: #{rec_resnet_backbone_forward.17} parent=0 // pred_fallthru
    _

// kernel: rec_resnet_backbone_forward.16
$region0: #{rec_resnet_backbone_forward.16}
  #allocation0 [shape = 'u32[]', space=smem, size = 0x4, offset = 0x4, fixed_abs, tag = 'smem constant byte address 0x4 - core index']
  #allocation1 [shape = 'u32[72,128]{1,0:T(1,128)}', space=vmem, size = 0x9000, scoped, tag = 'internal scratch']
  %s0 = inlined_call_operand.vmem [shape: bf16[16,288], index: 0, kind: input, shape index: {}]
  %s1 = inlined_call_operand.vmem [shape: bf16[288,128], index: 1, kind: input, shape index: {}]
  %s2 = inlined_call_operand.vmem [shape: f32[1,128], index: 2, kind: input, shape index: {}]
  %s3 = inlined_call_operand.vmem [shape: f32[16,128], index: 3, kind: output, shape index: {}]
  %s4 = sld [smem:[#allocation0]]
  $region22: #{rec_resnet_backbone_forward.16} parent=0
    _
  %s6 = ssub.s32 1, %s4
  %s7 = scalar_select 0, %s6, %s4
  // Predicated region
  $region2: #{rec_resnet_backbone_forward.16} parent=0 // pred_check
    _
  $region3: #{rec_resnet_backbone_forward.16} parent=0 // pred_check_branch
    %9 = sbr.rel (0) target = $region5
  $region4: #{rec_resnet_backbone_forward.16} parent=0 // pred_region
    _
  $region5: #{rec_resnet_backbone_forward.16} parent=0 // pred_fallthru
    _
  // Predicated region
  $region6: #{rec_resnet_backbone_forward.16} parent=0 // pred_check
    _
  $region7: #{rec_resnet_backbone_forward.16} parent=0 // pred_check_branch
    %11 = sbr.rel (0) target = $region9
  $region8: #{rec_resnet_backbone_forward.16} parent=0 // pred_region
    _
  $region9: #{rec_resnet_backbone_forward.16} parent=0 // pred_fallthru
    _
  // Predicated region
  $region10: #{rec_resnet_backbone_forward.16} parent=0 // pred_check
    _
  $region11: #{rec_resnet_backbone_forward.16} parent=0 // pred_check_branch
    %13 = sbr.rel (0) target = $region13
  $region12: #{rec_resnet_backbone_forward.16} parent=0 // pred_region
    _
  $region13: #{rec_resnet_backbone_forward.16} parent=0 // pred_fallthru
    _
  %v15 = vld [vmem:[%s0] sm:$0xff]
  %v16 = vld [vmem:[%s0 + $0x8] sm:$0xf]
  %v17 = vld [vmem:[%s0 + $0xc] sm:$0xff]
  %v18 = vld [vmem:[%s0 + $0x14] sm:$0xf]
  %v19 = vld [vmem:[%s1] sm:$0xf]
  %v20 = vld [vmem:[%s1 + $0x4] sm:$0xf]
  %v21 = vld [vmem:[%s1 + $0x8] sm:$0xf]
  %v22 = vld [vmem:[%s1 + $0xc] sm:$0xf]
  %v23 = vld [vmem:[%s1 + $0x10] sm:$0xf]
  %v24 = vld [vmem:[%s1 + $0x14] sm:$0xf]
  %v25 = vld [vmem:[%s1 + $0x18] sm:$0xf]
  %v26 = vld [vmem:[%s1 + $0x1c] sm:$0xf]
  %v27 = vld [vmem:[%s1 + $0x20] sm:$0xf]
  %v28 = vld [vmem:[%s1 + $0x24] sm:$0xf]
  %v29 = vld [vmem:[%s1 + $0x28] sm:$0xf]
  %v30 = vld [vmem:[%s1 + $0x2c] sm:$0xf]
  %v31 = vld [vmem:[%s1 + $0x30] sm:$0xf]
  %v32 = vld [vmem:[%s1 + $0x34] sm:$0xf]
  %v33 = vld [vmem:[%s1 + $0x38] sm:$0xf]
  %v34 = vld [vmem:[%s1 + $0x3c] sm:$0xf]
  %v35 = vld [vmem:[%s1 + $0x40] sm:$0xf]
  %v36 = vld [vmem:[%s1 + $0x44] sm:$0xf]
  %v37 = vld [vmem:[%s1 + $0x48] sm:$0xf]
  %v38 = vld [vmem:[%s1 + $0x4c] sm:$0xf]
  %v39 = vld [vmem:[%s1 + $0x50] sm:$0xf]
  %v40 = vld [vmem:[%s1 + $0x54] sm:$0xf]
  %v41 = vld [vmem:[%s1 + $0x58] sm:$0xf]
  %v42 = vld [vmem:[%s1 + $0x5c] sm:$0xf]
  %v43 = vld [vmem:[%s1 + $0x60] sm:$0xf]
  %v44 = vld [vmem:[%s1 + $0x64] sm:$0xf]
  %v45 = vld [vmem:[%s1 + $0x68] sm:$0xf]
  %v46 = vld [vmem:[%s1 + $0x6c] sm:$0xf]
  %v47 = vld [vmem:[%s1 + $0x70] sm:$0xf]
  %v48 = vld [vmem:[%s1 + $0x74] sm:$0xf]
  %v49 = vld [vmem:[%s1 + $0x78] sm:$0xf]
  %v50 = vld [vmem:[%s1 + $0x7c] sm:$0xf]
  %v51 = vld [vmem:[%s1 + $0x80] sm:$0xf]
  %v52 = vld [vmem:[%s1 + $0x84] sm:$0xf]
  %v53 = vld [vmem:[%s1 + $0x88] sm:$0xf]
  %v54 = vld [vmem:[%s1 + $0x8c] sm:$0xf]
  %v55 = vld [vmem:[%s2] sm:$0x1]
  %v57 = vperm.slane %v55, 0
  %v63 = vunpack.c.l.b16 %v15
  %v64 = vunpack.c.h.b16 %v15
  %v65 = vunpack.c.l.b16 %v16
  %v66 = vunpack.c.l.b16 %v17
  %v67 = vunpack.c.h.b16 %v17
  %v68 = vunpack.c.l.b16 %v18
  %v69 = vpack.c.b16 %v66, %v63
  %v70 = vpack.c.b16 %v67, %v64
  %v71 = vpack.c.b16 %v68, %v65
  %v110 = vunpack.c.l.b16 %v19
  %v111 = vunpack.c.l.b16 %v20
  %v112 = vunpack.c.l.b16 %v21
  %v113 = vunpack.c.l.b16 %v22
  %v114 = vunpack.c.l.b16 %v23
  %v115 = vunpack.c.l.b16 %v24
  %v116 = vunpack.c.l.b16 %v25
  %v117 = vunpack.c.l.b16 %v26
  %v118 = vunpack.c.l.b16 %v27
  %v119 = vunpack.c.l.b16 %v28
  %v120 = vunpack.c.l.b16 %v29
  %v121 = vunpack.c.l.b16 %v30
  %v122 = vunpack.c.l.b16 %v31
  %v123 = vunpack.c.l.b16 %v32
  %v124 = vunpack.c.l.b16 %v33
  %v125 = vunpack.c.l.b16 %v34
  %v126 = vunpack.c.l.b16 %v35
  %v127 = vunpack.c.l.b16 %v36
  %v128 = vunpack.c.l.b16 %v37
  %v129 = vunpack.c.l.b16 %v38
  %v130 = vunpack.c.l.b16 %v39
  %v131 = vunpack.c.l.b16 %v40
  %v132 = vunpack.c.l.b16 %v41
  %v133 = vunpack.c.l.b16 %v42
  %v134 = vunpack.c.l.b16 %v43
  %v135 = vunpack.c.l.b16 %v44
  %v136 = vunpack.c.l.b16 %v45
  %v137 = vunpack.c.l.b16 %v46
  %v138 = vunpack.c.l.b16 %v47
  %v139 = vunpack.c.l.b16 %v48
  %v140 = vunpack.c.l.b16 %v49
  %v141 = vunpack.c.l.b16 %v50
  %v142 = vunpack.c.l.b16 %v51
  %v143 = vunpack.c.l.b16 %v52
  %v144 = vunpack.c.l.b16 %v53
  %v145 = vunpack.c.l.b16 %v54
  %v146 = vpack.c.b16 %v111, %v110
  %v147 = vpack.c.b16 %v113, %v112
  %v148 = vpack.c.b16 %v115, %v114
  %v149 = vpack.c.b16 %v117, %v116
  %v150 = vpack.c.b16 %v119, %v118
  %v151 = vpack.c.b16 %v121, %v120
  %v152 = vpack.c.b16 %v123, %v122
  %v153 = vpack.c.b16 %v125, %v124
  %v154 = vpack.c.b16 %v127, %v126
  %v155 = vpack.c.b16 %v129, %v128
  %v156 = vpack.c.b16 %v131, %v130
  %v157 = vpack.c.b16 %v133, %v132
  %v158 = vpack.c.b16 %v135, %v134
  %v159 = vpack.c.b16 %v137, %v136
  %v160 = vpack.c.b16 %v139, %v138
  %v161 = vpack.c.b16 %v141, %v140
  %v162 = vpack.c.b16 %v143, %v142
  %v163 = vpack.c.b16 %v145, %v144
  %vm182 = vcmask 261120
  %v184 = vsel %vm182, %v71, 0
  %186 = vmatpush.bf16.msra.mxu0 %v153
  %187 = vmatpush.bf16.msra.mxu0 %v152
  %188 = vmatpush.bf16.msra.mxu0 %v151
  %189 = vmatpush.bf16.msra.mxu0 %v150
  %190 = vmatpush.bf16.msra.mxu0 %v149
  %191 = vmatpush.bf16.msra.mxu0 %v148
  %192 = vmatpush.bf16.msra.mxu0 %v147
  %193 = vmatpush.bf16.msra.mxu0 %v146
  %194 = vmatmul.bf16.gmra.mxu0 %v69
  %v195 = vpop.f32.mrf.mxu0
  %v196 = vadd.f32 %v57, %v195
  %v197 = vpop.f32.mrf.mxu0
  %v198 = vadd.f32 %v57, %v197
  %199 = vdwg.mxu0
  %200 = vmatpush.bf16.msra.mxu0 %v161
  %201 = vmatpush.bf16.msra.mxu0 %v160
  %202 = vmatpush.bf16.msra.mxu0 %v159
  %203 = vmatpush.bf16.msra.mxu0 %v158
  %204 = vmatpush.bf16.msra.mxu0 %v157
  %205 = vmatpush.bf16.msra.mxu0 %v156
  %206 = vmatpush.bf16.msra.mxu0 %v155
  %207 = vmatpush.bf16.msra.mxu0 %v154
  %208 = vmatmul.bf16.gmra.mxu0 %v70
  %v209 = vpop.f32.mrf.mxu0
  %v210 = vadd.f32 %v196, %v209
  %v211 = vpop.f32.mrf.mxu0
  %v212 = vadd.f32 %v198, %v211
  %213 = vdwg.mxu0
  %214 = vmatpush.bf16.msra.mxu0 0
  %215 = vmatpush.bf16.msra.mxu0 0
  %216 = vmatpush.bf16.msra.mxu0 0
  %217 = vmatpush.bf16.msra.mxu0 0
  %218 = vmatpush.bf16.msra.mxu0 0
  %219 = vmatpush.bf16.msra.mxu0 0
  %220 = vmatpush.bf16.msra.mxu0 %v163
  %221 = vmatpush.bf16.msra.mxu0 %v162
  %222 = vmatmul.bf16.gmra.mxu0 %v184
  %v223 = vpop.f32.mrf.mxu0
  %v224 = vadd.f32 %v210, %v223
  %v225 = vpop.f32.mrf.mxu0
  %v226 = vadd.f32 %v212, %v225
  %227 = vdwg.mxu0
  %228 = vst [vmem:[%s3] sm:$0xff] %v224
  %229 = vst [vmem:[%s3 + $0x8] sm:$0xff] %v226
  // Predicated region
  $region14: #{rec_resnet_backbone_forward.16} parent=0 // pred_check
    _
  $region15: #{rec_resnet_backbone_forward.16} parent=0 // pred_check_branch
    %231 = sbr.rel (0) target = $region17
  $region16: #{rec_resnet_backbone_forward.16} parent=0 // pred_region
    _
  $region17: #{rec_resnet_backbone_forward.16} parent=0 // pred_fallthru
    _
  // Predicated region
  $region18: #{rec_resnet_backbone_forward.16} parent=0 // pred_check
    _
  $region19: #{rec_resnet_backbone_forward.16} parent=0 // pred_check_branch
    %233 = sbr.rel (0) target = $region21
  $region20: #{rec_resnet_backbone_forward.16} parent=0 // pred_region
    _
  $region21: #{rec_resnet_backbone_forward.16} parent=0 // pred_fallthru
    _

// kernel: rec_resnet_backbone_forward.15
$region0: #{rec_resnet_backbone_forward.15}
  #allocation0 [shape = 'u32[]', space=smem, size = 0x4, offset = 0x4, fixed_abs, tag = 'smem constant byte address 0x4 - core index']
  #allocation1 [shape = 'u32[72,128]{1,0:T(1,128)}', space=vmem, size = 0x9000, scoped, tag = 'internal scratch']
  %s0 = inlined_call_operand.vmem [shape: bf16[32,144], index: 0, kind: input, shape index: {}]
  %s1 = inlined_call_operand.vmem [shape: bf16[144,128], index: 1, kind: input, shape index: {}]
  %s2 = inlined_call_operand.vmem [shape: f32[1,128], index: 2, kind: input, shape index: {}]
  %s3 = inlined_call_operand.hbm [shape: f32[32,128], index: 3, kind: output, shape index: {}]
  %s4 = sld [smem:[#allocation0]]
  $region22: #{rec_resnet_backbone_forward.15} parent=0
    _
  %s6 = ssub.s32 1, %s4
  %s7 = scalar_select 0, %s6, %s4
  $region1: #{rec_resnet_backbone_forward.15} parent=0
    #allocation2 [shape = 'u8[16384]{0}', space=vmem, size = 0x4000, scoped, tag = 'output window, operand 0, single buffered']
    #allocation3 [shape = 's32[1]{0}', space=sflag, size = 0x4, scoped, tag = 'scoped memory for rec_resnet_backbone_forward.15']
    %8 = vsyncpa [#allocation3], 0
    // Predicated region
    $region2: #{rec_resnet_backbone_forward.15} parent=1 // pred_check
      _
    $region3: #{rec_resnet_backbone_forward.15} parent=1 // pred_check_branch
      %10 = sbr.rel (0) target = $region5
    $region4: #{rec_resnet_backbone_forward.15} parent=1 // pred_region
      _
    $region5: #{rec_resnet_backbone_forward.15} parent=1 // pred_fallthru
      _
    // Predicated region
    $region6: #{rec_resnet_backbone_forward.15} parent=1 // pred_check
      _
    $region7: #{rec_resnet_backbone_forward.15} parent=1 // pred_check_branch
      %12 = sbr.rel (0) target = $region9
    $region8: #{rec_resnet_backbone_forward.15} parent=1 // pred_region
      _
    $region9: #{rec_resnet_backbone_forward.15} parent=1 // pred_fallthru
      _
    // Predicated region
    $region10: #{rec_resnet_backbone_forward.15} parent=1 // pred_check
      _
    $region11: #{rec_resnet_backbone_forward.15} parent=1 // pred_check_branch
      %14 = sbr.rel (0) target = $region13
    $region12: #{rec_resnet_backbone_forward.15} parent=1 // pred_region
      _
    $region13: #{rec_resnet_backbone_forward.15} parent=1 // pred_fallthru
      _
    %v16 = vld [vmem:[%s0] sm:$0xff]
    %v17 = vld [vmem:[%s0 + $0x8] sm:$0xff]
    %v18 = vld [vmem:[%s0 + $0x10] sm:$0xff]
    %v19 = vld [vmem:[%s0 + $0x18] sm:$0xff]
    %v20 = vld [vmem:[%s1] sm:$0xf]
    %v21 = vld [vmem:[%s1 + $0x4] sm:$0xf]
    %v22 = vld [vmem:[%s1 + $0x8] sm:$0xf]
    %v23 = vld [vmem:[%s1 + $0xc] sm:$0xf]
    %v24 = vld [vmem:[%s1 + $0x10] sm:$0xf]
    %v25 = vld [vmem:[%s1 + $0x14] sm:$0xf]
    %v26 = vld [vmem:[%s1 + $0x18] sm:$0xf]
    %v27 = vld [vmem:[%s1 + $0x1c] sm:$0xf]
    %v28 = vld [vmem:[%s1 + $0x20] sm:$0xf]
    %v29 = vld [vmem:[%s1 + $0x24] sm:$0xf]
    %v30 = vld [vmem:[%s1 + $0x28] sm:$0xf]
    %v31 = vld [vmem:[%s1 + $0x2c] sm:$0xf]
    %v32 = vld [vmem:[%s1 + $0x30] sm:$0xf]
    %v33 = vld [vmem:[%s1 + $0x34] sm:$0xf]
    %v34 = vld [vmem:[%s1 + $0x38] sm:$0xf]
    %v35 = vld [vmem:[%s1 + $0x3c] sm:$0xf]
    %v36 = vld [vmem:[%s1 + $0x40] sm:$0xf]
    %v37 = vld [vmem:[%s1 + $0x44] sm:$0xf]
    %v38 = vld [vmem:[%s2] sm:$0x1]
    %v40 = vperm.slane %v38, 0
    %v46 = vunpack.c.l.b16 %v16
    %v47 = vunpack.c.h.b16 %v16
    %v48 = vunpack.c.l.b16 %v17
    %v49 = vunpack.c.h.b16 %v17
    %v50 = vunpack.c.l.b16 %v18
    %v51 = vunpack.c.h.b16 %v18
    %v52 = vunpack.c.l.b16 %v19
    %v53 = vunpack.c.h.b16 %v19
    %v54 = vpack.c.b16 %v48, %v46
    %v55 = vpack.c.b16 %v49, %v47
    %v56 = vpack.c.b16 %v52, %v50
    %v57 = vpack.c.b16 %v53, %v51
    %v78 = vunpack.c.l.b16 %v20
    %v79 = vunpack.c.l.b16 %v21
    %v80 = vunpack.c.l.b16 %v22
    %v81 = vunpack.c.l.b16 %v23
    %v82 = vunpack.c.l.b16 %v24
    %v83 = vunpack.c.l.b16 %v25
    %v84 = vunpack.c.l.b16 %v26
    %v85 = vunpack.c.l.b16 %v27
    %v86 = vunpack.c.l.b16 %v28
    %v87 = vunpack.c.l.b16 %v29
    %v88 = vunpack.c.l.b16 %v30
    %v89 = vunpack.c.l.b16 %v31
    %v90 = vunpack.c.l.b16 %v32
    %v91 = vunpack.c.l.b16 %v33
    %v92 = vunpack.c.l.b16 %v34
    %v93 = vunpack.c.l.b16 %v35
    %v94 = vunpack.c.l.b16 %v36
    %v95 = vunpack.c.l.b16 %v37
    %v96 = vpack.c.b16 %v79, %v78
    %v97 = vpack.c.b16 %v81, %v80
    %v98 = vpack.c.b16 %v83, %v82
    %v99 = vpack.c.b16 %v85, %v84
    %v100 = vpack.c.b16 %v87, %v86
    %v101 = vpack.c.b16 %v89, %v88
    %v102 = vpack.c.b16 %v91, %v90
    %v103 = vpack.c.b16 %v93, %v92
    %v104 = vpack.c.b16 %v95, %v94
    %vm114 = vcmask 130048
    %v116 = vsel %vm114, %v55, 0
    %v119 = vsel %vm114, %v57, 0
    %121 = vmatpush.bf16.msra.mxu0 %v103
    %122 = vmatpush.bf16.msra.mxu0 %v102
    %123 = vmatpush.bf16.msra.mxu0 %v101
    %124 = vmatpush.bf16.msra.mxu0 %v100
    %125 = vmatpush.bf16.msra.mxu0 %v99
    %126 = vmatpush.bf16.msra.mxu0 %v98
    %127 = vmatpush.bf16.msra.mxu0 %v97
    %128 = vmatpush.bf16.msra.mxu0 %v96
    %129 = vmatmul.bf16.gmra.mxu0 %v54
    %v130 = vpop.f32.mrf.mxu0
    %v131 = vadd.f32 %v40, %v130
    %v132 = vpop.f32.mrf.mxu0
    %v133 = vadd.f32 %v40, %v132
    %134 = vmatmul.bf16.gmra.mxu0 %v56
    %v135 = vpop.f32.mrf.mxu0
    %v136 = vadd.f32 %v40, %v135
    %v137 = vpop.f32.mrf.mxu0
    %v138 = vadd.f32 %v40, %v137
    %139 = vdwg.mxu0
    %140 = vmatpush.bf16.msra.mxu0 0
    %141 = vmatpush.bf16.msra.mxu0 0
    %142 = vmatpush.bf16.msra.mxu0 0
    %143 = vmatpush.bf16.msra.mxu0 0
    %144 = vmatpush.bf16.msra.mxu0 0
    %145 = vmatpush.bf16.msra.mxu0 0
    %146 = vmatpush.bf16.msra.mxu0 0
    %147 = vmatpush.bf16.msra.mxu0 %v104
    %148 = vmatmul.bf16.gmra.mxu0 %v116
    %v149 = vpop.f32.mrf.mxu0
    %v150 = vadd.f32 %v131, %v149
    %v151 = vpop.f32.mrf.mxu0
    %v152 = vadd.f32 %v133, %v151
    %153 = vmatmul.bf16.gmra.mxu0 %v119
    %v154 = vpop.f32.mrf.mxu0
    %v155 = vadd.f32 %v136, %v154
    %v156 = vpop.f32.mrf.mxu0
    %v157 = vadd.f32 %v138, %v156
    %158 = vdwg.mxu0
    %159 = vst [vmem:[#allocation2] sm:$0xff] %v150
    %160 = vst [vmem:[#allocation2 + $0x8] sm:$0xff] %v152
    %161 = vst [vmem:[#allocation2 + $0x10] sm:$0xff] %v155
    %162 = vst [vmem:[#allocation2 + $0x18] sm:$0xff] %v157
    // Predicated region
    $region14: #{rec_resnet_backbone_forward.15} parent=1 // pred_check
      _
    $region15: #{rec_resnet_backbone_forward.15} parent=1 // pred_check_branch
      %164 = sbr.rel (0) target = $region17
    $region16: #{rec_resnet_backbone_forward.15} parent=1 // pred_region
      %166 = vsyncadd [#allocation3], 0
      %s167 = sshll.u32 [#allocation2], 4
      %s168 = int_to_ptr.vmem [resolvable:$true] %s167
      %s169 = sshll.u32 %s3, 4
      %s170 = int_to_ptr.hbm [resolvable:$true] %s169
      %175 = dma.vmem_to_hbm [thread:$0]  %s168, 512, %s170, [#allocation3], 128, 128, 8
    $region17: #{rec_resnet_backbone_forward.15} parent=1 // pred_fallthru
      _
    // Predicated region
    $region18: #{rec_resnet_backbone_forward.15} parent=1 // pred_check
      _
    $region19: #{rec_resnet_backbone_forward.15} parent=1 // pred_check_branch
      %177 = sbr.rel (0) target = $region21
    $region20: #{rec_resnet_backbone_forward.15} parent=1 // pred_region
      %179 = dma.done [#allocation3], 512
    $region21: #{rec_resnet_backbone_forward.15} parent=1 // pred_fallthru
      _
    %180 = vsyncpa [#allocation3], 1

// kernel: rec_resnet_backbone_forward.14
$region0: #{rec_resnet_backbone_forward.14}
  #allocation0 [shape = 'u32[]', space=smem, size = 0x4, offset = 0x4, fixed_abs, tag = 'smem constant byte address 0x4 - core index']
  #allocation1 [shape = 'u32[72,128]{1,0:T(1,128)}', space=vmem, size = 0x9000, scoped, tag = 'internal scratch']
  %s0 = inlined_call_operand.vmem [shape: bf16[128,72], index: 0, kind: input, shape index: {}]
  %s1 = inlined_call_operand.vmem [shape: bf16[72,128], index: 1, kind: input, shape index: {}]
  %s2 = inlined_call_operand.vmem [shape: f32[1,128], index: 2, kind: input, shape index: {}]
  %s3 = inlined_call_operand.hbm [shape: f32[128,128], index: 3, kind: output, shape index: {}]
  %s4 = sld [smem:[#allocation0]]
  $region45: #{rec_resnet_backbone_forward.14} parent=0
    _
  %s6 = ssub.s32 1, %s4
  %s7 = scalar_select 0, %s6, %s4
  $region1: #{rec_resnet_backbone_forward.14} parent=0
    #allocation2 [shape = 'u8[65536]{0}', space=vmem, size = 0x10000, scoped, tag = 'output window, operand 0']
    #allocation3 [shape = 's32[2]{0}', space=sflag, size = 0x8, scoped, tag = 'scoped memory for rec_resnet_backbone_forward.14']
    %8 = vsyncpa [#allocation3], 0
    %s9 = scalar_lea.sflag [#allocation3], 1
    %10 = vsyncpa %s9, 0
    loop: start=0, step=1, limit=4
    $region2: #{rec_resnet_backbone_forward.14} parent=1 // loop_pre_header
      _
    $region3: #{rec_resnet_backbone_forward.14} parent=1 // loop_header
      %s12 = sphi 0, %s16
      %p13 = scmp.ge.s32.totalorder %s12, 4
      %s22 = sphi 0, %s24
      %s25 = sphi 0, %s22
      %s26 = sphi 0, %s25
      %s42 = sphi 0, %s26
      %s46 = sphi 0, %s46
      %s48 = sphi 0, %s46
      %s49 = sphi 0, %s48
      %s63 = sphi 0, %s49
      %s67 = sphi 0, %s67
      %s69 = sphi 0, %s67
      %s70 = sphi 0, %s69
      %s84 = sphi 0, %s70
      %s90 = sphi 0, %s92
      %s93 = sphi 0, %s90
      %s94 = sphi 0, %s93
      %s110 = sphi 0, %s94
    $region4: #{rec_resnet_backbone_forward.14} parent=1 // loop_header_branch
      %15 = sbr.rel (%p13) target = $region8
    $region5: #{rec_resnet_backbone_forward.14} parent=1 // loop_body
      %s17 = ssub.s32 %s12, 1
      %s18 = ssub.s32 %s12, 2
      %s19 = sadd.s32 %s12, 1
      %s20 = ssub.s32 %s12, %s19
      %p21 = scmp.eq.s32.totalorder %s20, 0
      %s23 = sadd.s32 %s22, 1
      %s24 = scalar_select %p21, %s22, %s23
      %p27 = pneg %p21
      %p28 = scmp.eq.s32.totalorder %s12, 1
      %p29 = por %p27, %p28
      %p30 = scmp.ne.s32.totalorder %s22, %s25
      %p31 = scmp.eq.s32.totalorder %s12, 0
      %p32 = por %p30, %p31
      %p33 = scmp.ne.s32.totalorder %s22, %s25
      %p34 = scmp.eq.s32.totalorder %s17, 1
      %p35 = por %p33, %p34
      %p36 = scmp.ne.s32.totalorder %s25, %s26
      %p37 = scmp.eq.s32.totalorder %s17, 0
      %p38 = por %p36, %p37
      %p39 = scmp.ne.s32.totalorder %s25, %s26
      %p40 = scmp.eq.s32.totalorder %s18, 1
      %p41 = por %p39, %p40
      %p43 = scmp.ne.s32.totalorder %s26, %s42
      %p44 = scmp.eq.s32.totalorder %s18, 0
      %p45 = por %p43, %p44
      %s47 = sadd.s32 %s46, 1
      %p50 = scmp.eq.s32.totalorder %s12, 1
      %p51 = scmp.ne.s32.totalorder %s46, %s48
      %p52 = scmp.eq.s32.totalorder %s12, 0
      %p53 = por %p51, %p52
      %p54 = scmp.ne.s32.totalorder %s46, %s48
      %p55 = scmp.eq.s32.totalorder %s17, 1
      %p56 = por %p54, %p55
      %p57 = scmp.ne.s32.totalorder %s48, %s49
      %p58 = scmp.eq.s32.totalorder %s17, 0
      %p59 = por %p57, %p58
      %p60 = scmp.ne.s32.totalorder %s48, %s49
      %p61 = scmp.eq.s32.totalorder %s18, 1
      %p62 = por %p60, %p61
      %p64 = scmp.ne.s32.totalorder %s49, %s63
      %p65 = scmp.eq.s32.totalorder %s18, 0
      %p66 = por %p64, %p65
      %s68 = sadd.s32 %s67, 1
      %p71 = scmp.eq.s32.totalorder %s12, 1
      %p72 = scmp.ne.s32.totalorder %s67, %s69
      %p73 = scmp.eq.s32.totalorder %s12, 0
      %p74 = por %p72, %p73
      %p75 = scmp.ne.s32.totalorder %s67, %s69
      %p76 = scmp.eq.s32.totalorder %s17, 1
      %p77 = por %p75, %p76
      %p78 = scmp.ne.s32.totalorder %s69, %s70
      %p79 = scmp.eq.s32.totalorder %s17, 0
      %p80 = por %p78, %p79
      %p81 = scmp.ne.s32.totalorder %s69, %s70
      %p82 = scmp.eq.s32.totalorder %s18, 1
      %p83 = por %p81, %p82
      %p85 = scmp.ne.s32.totalorder %s70, %s84
      %p86 = scmp.eq.s32.totalorder %s18, 0
      %p87 = por %p85, %p86
      %s88 = ssub.s32 %s12, %s19
      %p89 = scmp.eq.s32.totalorder %s88, 0
      %s91 = sadd.s32 %s90, 1
      %s92 = scalar_select %p89, %s90, %s91
      %p95 = pneg %p89
      %p96 = scmp.eq.s32.totalorder %s12, 1
      %p97 = por %p95, %p96
      %p98 = scmp.ne.s32.totalorder %s90, %s93
      %p99 = scmp.eq.s32.totalorder %s12, 0
      %p100 = por %p98, %p99
      %p101 = scmp.ne.s32.totalorder %s90, %s93
      %p102 = scmp.eq.s32.totalorder %s17, 1
      %p103 = por %p101, %p102
      %p104 = scmp.ne.s32.totalorder %s93, %s94
      %p105 = scmp.eq.s32.totalorder %s17, 0
      %p106 = por %p104, %p105
      %p107 = scmp.ne.s32.totalorder %s93, %s94
      %p108 = scmp.eq.s32.totalorder %s18, 1
      %p109 = por %p107, %p108
      %p111 = scmp.ne.s32.totalorder %s94, %s110
      %p112 = scmp.eq.s32.totalorder %s18, 0
      %p113 = por %p111, %p112
      %p114 = scmp.le.s32.totalorder 1, %s12
      %p115 = scmp.lt.s32.totalorder %s12, 3
      %p116 = pnand %p114, %p115
      %p117 = pneg %p116
      // Predicated region
      $region9: #{rec_resnet_backbone_forward.14} parent=5 // pred_check
        _
      $region10: #{rec_resnet_backbone_forward.14} parent=5 // pred_check_branch
        %119 = sbr.rel (%p116) target = $region12
      $region11: #{rec_resnet_backbone_forward.14} parent=5 // pred_region
        %s120 = ssub.s32 %s12, 1
        // Predicated region
        $region13: #{rec_resnet_backbone_forward.14} parent=11 // pred_check
          %p121 = pneg %p59
        $region14: #{rec_resnet_backbone_forward.14} parent=11 // pred_check_branch
          %123 = sbr.rel (%p121) target = $region16
        $region15: #{rec_resnet_backbone_forward.14} parent=11 // pred_region
          _
        $region16: #{rec_resnet_backbone_forward.14} parent=11 // pred_fallthru
          _
        // Predicated region
        $region17: #{rec_resnet_backbone_forward.14} parent=11 // pred_check
          %p124 = pneg %p80
        $region18: #{rec_resnet_backbone_forward.14} parent=11 // pred_check_branch
          %126 = sbr.rel (%p124) target = $region20
        $region19: #{rec_resnet_backbone_forward.14} parent=11 // pred_region
          _
        $region20: #{rec_resnet_backbone_forward.14} parent=11 // pred_fallthru
          _
      $region12: #{rec_resnet_backbone_forward.14} parent=5 // pred_fallthru
        _
      %p127 = scmp.lt.s32.totalorder %s12, 2
      // Predicated region
      $region21: #{rec_resnet_backbone_forward.14} parent=5 // pred_check
        %p128 = pneg %p127
      $region22: #{rec_resnet_backbone_forward.14} parent=5 // pred_check_branch
        %130 = sbr.rel (%p128) target = $region24
      $region23: #{rec_resnet_backbone_forward.14} parent=5 // pred_region
        // Predicated region
        $region25: #{rec_resnet_backbone_forward.14} parent=23 // pred_check
          %p131 = pneg %p32
        $region26: #{rec_resnet_backbone_forward.14} parent=23 // pred_check_branch
          %133 = sbr.rel (%p131) target = $region28
        $region27: #{rec_resnet_backbone_forward.14} parent=23 // pred_region
          %s134 = smul.u32 8, %s12
          %p135 = scmp.lt.s32.totalorder %s134, 15
          %s136 = scalar_select %p135, %s134, 15
          %s137 = smul.addr %s136, 4
          %s138 = scalar_lea.vmem %s0, %s137
          %s139 = smul.u32 8, %s12
        $region28: #{rec_resnet_backbone_forward.14} parent=23 // pred_fallthru
          _
      $region24: #{rec_resnet_backbone_forward.14} parent=5 // pred_fallthru
        _
      %p140 = scmp.le.s32.totalorder 1, %s12
      %p141 = scmp.lt.s32.totalorder %s12, 3
      %p142 = pnand %p140, %p141
      %p143 = pneg %p142
      // Predicated region
      $region29: #{rec_resnet_backbone_forward.14} parent=5 // pred_check
        _
      $region30: #{rec_resnet_backbone_forward.14} parent=5 // pred_check_branch
        %145 = sbr.rel (%p142) target = $region32
      $region31: #{rec_resnet_backbone_forward.14} parent=5 // pred_region
        %s146 = ssub.s32 %s12, 1
        %s147 = smul.u32 8, %s17
        %p148 = scmp.lt.s32.totalorder %s147, 15
        %s149 = scalar_select %p148, %s147, 15
        %s150 = smul.addr %s149, 4
        %s151 = scalar_lea.vmem %s0, %s150
        %p152 = pneg %p38
        %p153 = pneg %p35
        %p154 = pneg %p59
        %p155 = pneg %p56
        %p156 = pneg %p80
        %p157 = pneg %p77
        %p158 = pneg %p106
        %p159 = pneg %p103
        %s160 = sand.u32 %s93, 1
        %s161 = scalar_lea.sflag [#allocation3], %s160
        %s162 = sand.u32 %s93, 1
        %s163 = smul.addr %s162, 64
        %s164 = scalar_lea.vmem [#allocation2], %s163
        %s165 = smul.u32 8, %s17
        %p166 = scmp.lt.s32.totalorder %s165, 15
        %s167 = scalar_select %p166, %s165, 15
        %s168 = smul.addr %s167, 4
        %s169 = scalar_lea.vmem %s0, %s168
        %s170 = smul.u32 8, %s17
        %s171 = smul.u32 8, %s17
        %v173 = vld [vmem:[%s169] sm:$0xf]
        %v174 = vld [vmem:[%s169 + $0x4] sm:$0xf]
        %v175 = vld [vmem:[%s169 + $0x8] sm:$0xf]
        %v176 = vld [vmem:[%s169 + $0xc] sm:$0xf]
        %v177 = vld [vmem:[%s169 + $0x10] sm:$0xf]
        %v178 = vld [vmem:[%s169 + $0x14] sm:$0xf]
        %v179 = vld [vmem:[%s169 + $0x18] sm:$0xf]
        %v180 = vld [vmem:[%s169 + $0x1c] sm:$0xf]
        %v181 = vld [vmem:[%s1] sm:$0xf]
        %v182 = vld [vmem:[%s1 + $0x4] sm:$0xf]
        %v183 = vld [vmem:[%s1 + $0x8] sm:$0xf]
        %v184 = vld [vmem:[%s1 + $0xc] sm:$0xf]
        %v185 = vld [vmem:[%s1 + $0x10] sm:$0xf]
        %v186 = vld [vmem:[%s1 + $0x14] sm:$0xf]
        %v187 = vld [vmem:[%s1 + $0x18] sm:$0xf]
        %v188 = vld [vmem:[%s1 + $0x1c] sm:$0xf]
        %v189 = vld [vmem:[%s1 + $0x20] sm:$0xf]
        %v190 = vld [vmem:[%s2] sm:$0x1]
        %v192 = vperm.slane %v190, 0
        %v202 = vunpack.c.l.b16 %v173
        %v203 = vunpack.c.l.b16 %v174
        %v204 = vunpack.c.l.b16 %v175
        %v205 = vunpack.c.l.b16 %v176
        %v206 = vunpack.c.l.b16 %v177
        %v207 = vunpack.c.l.b16 %v178
        %v208 = vunpack.c.l.b16 %v179
        %v209 = vunpack.c.l.b16 %v180
        %v210 = vpack.c.b16 %v203, %v202
        %v211 = vpack.c.b16 %v205, %v204
        %v212 = vpack.c.b16 %v207, %v206
        %v213 = vpack.c.b16 %v209, %v208
        %v223 = vunpack.c.l.b16 %v181
        %v224 = vunpack.c.l.b16 %v182
        %v225 = vunpack.c.l.b16 %v183
        %v226 = vunpack.c.l.b16 %v184
        %v227 = vunpack.c.l.b16 %v185
        %v228 = vunpack.c.l.b16 %v186
        %v229 = vunpack.c.l.b16 %v187
        %v230 = vunpack.c.l.b16 %v188
        %v231 = vunpack.c.l.b16 %v189
        %v232 = vpack.c.b16 %v224, %v223
        %v233 = vpack.c.b16 %v226, %v225
        %v234 = vpack.c.b16 %v228, %v227
        %v235 = vpack.c.b16 %v230, %v229
        %v236 = vpack.c.b16 %v231, %v231
        %vm241 = vcmask 588800
        %v243 = vsel %vm241, %v210, 0
        %v246 = vsel %vm241, %v211, 0
        %v249 = vsel %vm241, %v212, 0
        %v252 = vsel %vm241, %v213, 0
        %vm254 = vcmask 1043456
        %v256 = vsel %vm254, %v236, 0
        %258 = vmatpush.bf16.msra.mxu0 0
        %259 = vmatpush.bf16.msra.mxu0 0
        %260 = vmatpush.bf16.msra.mxu0 0
        %261 = vmatpush.bf16.msra.mxu0 %v256
        %262 = vmatpush.bf16.msra.mxu0 %v235
        %263 = vmatpush.bf16.msra.mxu0 %v234
        %264 = vmatpush.bf16.msra.mxu0 %v233
        %265 = vmatpush.bf16.msra.mxu0 %v232
        %266 = vmatmul.bf16.gmra.mxu0 %v243
        %v267 = vpop.f32.mrf.mxu0
        %v268 = vadd.f32 %v192, %v267
        %v269 = vpop.f32.mrf.mxu0
        %v270 = vadd.f32 %v192, %v269
        %271 = vmatmul.bf16.gmra.mxu0 %v246
        %v272 = vpop.f32.mrf.mxu0
        %v273 = vadd.f32 %v192, %v272
        %v274 = vpop.f32.mrf.mxu0
        %v275 = vadd.f32 %v192, %v274
        %276 = vmatmul.bf16.gmra.mxu0 %v249
        %v277 = vpop.f32.mrf.mxu0
        %v278 = vadd.f32 %v192, %v277
        %v279 = vpop.f32.mrf.mxu0
        %v280 = vadd.f32 %v192, %v279
        %281 = vmatmul.bf16.gmra.mxu0 %v252
        %v282 = vpop.f32.mrf.mxu0
        %v283 = vadd.f32 %v192, %v282
        %v284 = vpop.f32.mrf.mxu0
        %v285 = vadd.f32 %v192, %v284
        %286 = vdwg.mxu0
        %287 = vst [vmem:[%s164] sm:$0xff] %v268
        %288 = vst [vmem:[%s164 + $0x8] sm:$0xff] %v270
        %289 = vst [vmem:[%s164 + $0x10] sm:$0xff] %v273
        %290 = vst [vmem:[%s164 + $0x18] sm:$0xff] %v275
        %291 = vst [vmem:[%s164 + $0x20] sm:$0xff] %v278
        %292 = vst [vmem:[%s164 + $0x28] sm:$0xff] %v280
        %293 = vst [vmem:[%s164 + $0x30] sm:$0xff] %v283
        %294 = vst [vmem:[%s164 + $0x38] sm:$0xff] %v285
        %s295 = sand.u32 %s93, 1
        %s296 = scalar_lea.sflag [#allocation3], %s295
        %s297 = sand.u32 %s93, 1
        %s298 = smul.addr %s297, 64
        %s299 = scalar_lea.vmem [#allocation2], %s298
        // Predicated region
        $region33: #{rec_resnet_backbone_forward.14} parent=31 // pred_check
          %p300 = pneg %p103
        $region34: #{rec_resnet_backbone_forward.14} parent=31 // pred_check_branch
          %302 = sbr.rel (%p300) target = $region36
        $region35: #{rec_resnet_backbone_forward.14} parent=31 // pred_region
          %s303 = smul.u32 8, %s17
          %305 = vsyncadd %s296, 0
          %s306 = smul.addr %s303, 8
          %s307 = scalar_lea.hbm %s3, %s306
          %s308 = sshll.u32 %s299, 4
          %s309 = int_to_ptr.vmem [resolvable:$true] %s308
          %s310 = sshll.u32 %s307, 4
          %s311 = int_to_ptr.hbm [resolvable:$true] %s310
          %316 = dma.vmem_to_hbm [thread:$0]  %s309, 1024, %s311, %s296, 128, 128, 8
        $region36: #{rec_resnet_backbone_forward.14} parent=31 // pred_fallthru
          _
      $region32: #{rec_resnet_backbone_forward.14} parent=5 // pred_fallthru
        _
      %p317 = scmp.le.s32.totalorder 2, %s12
      // Predicated region
      $region37: #{rec_resnet_backbone_forward.14} parent=5 // pred_check
        %p318 = pneg %p317
      $region38: #{rec_resnet_backbone_forward.14} parent=5 // pred_check_branch
        %320 = sbr.rel (%p318) target = $region40
      $region39: #{rec_resnet_backbone_forward.14} parent=5 // pred_region
        %s321 = ssub.s32 %s12, 2
        // Predicated region
        $region41: #{rec_resnet_backbone_forward.14} parent=39 // pred_check
          %p322 = pneg %p109
        $region42: #{rec_resnet_backbone_forward.14} parent=39 // pred_check_branch
          %324 = sbr.rel (%p322) target = $region44
        $region43: #{rec_resnet_backbone_forward.14} parent=39 // pred_region
          %s325 = sand.u32 %s94, 1
          %s326 = scalar_lea.sflag [#allocation3], %s325
          %s327 = sand.u32 %s94, 1
          %s328 = smul.addr %s327, 64
          %s329 = scalar_lea.vmem [#allocation2], %s328
          %331 = dma.done %s326, 1024
        $region44: #{rec_resnet_backbone_forward.14} parent=39 // pred_fallthru
          _
      $region40: #{rec_resnet_backbone_forward.14} parent=5 // pred_fallthru
        _
    $region6: #{rec_resnet_backbone_forward.14} parent=1 // loop_footer
      %s16 = sadd.s32 1, %s12
    $region7: #{rec_resnet_backbone_forward.14} parent=1 // loop_footer_branch
      %11 = sbr.rel target = $region3
    $region8: #{rec_resnet_backbone_forward.14} parent=1 // loop_exit
      _
    %332 = vsyncpa [#allocation3], 1
    %s333 = scalar_lea.sflag [#allocation3], 1
    %334 = vsyncpa %s333, 1

</llo_original>
